<compile_context>
chip_gen: v5e
topology: v5e:2x2
jax: 0.10.0
libtpu: 0.0.40
codegen_flags: <defaults>
</compile_context>

<pallas_src>
import jax
import jax.numpy as jnp
from jax import lax
from jax.experimental import pallas as pl
from jax.experimental.pallas import tpu as pltpu


# ---------------------------------------------------------------------------
# Kernel 1: fused BiLSTM recurrence + head contractions (per batch chunk).
# ---------------------------------------------------------------------------
def _bilstm_head_kernel(x_ref, len_ref, wih_ref, whh_ref, b_ref,
                        w1_ref, w2f_ref, w2b_ref,
                        ps_ref, pe_ref,
                        g_scr, peb_scr):
    BC = len_ref.shape[0]
    LBC = x_ref.shape[0]
    L = LBC // BC
    H = w2f_ref.shape[0]
    G4 = 4 * H
    hp = jax.lax.Precision.HIGHEST

    # Hoisted input projection: one big (L*BC, 2H) x (2H, 8H) MXU matmul,
    # bias folded in.  Columns 0:4H = forward gates, 4H:8H = backward gates.
    g_scr[...] = (jnp.dot(x_ref[...], wih_ref[...],
                          preferred_element_type=jnp.float32, precision=hp)
                  + b_ref[...])

    lens = len_ref[...]                                   # (BC, 1) int32
    zero = jnp.zeros((BC, H), jnp.float32)

    def cell(gates, h, c, valid):
        i = jax.nn.sigmoid(gates[:, 0 * H:1 * H])
        f = jax.nn.sigmoid(gates[:, 1 * H:2 * H])
        g = jnp.tanh(gates[:, 2 * H:3 * H])
        o = jax.nn.sigmoid(gates[:, 3 * H:4 * H])
        c_new = f * c + i * g
        h_new = o * jnp.tanh(c_new)
        h_out = jnp.where(valid, h_new, 0.0)              # padded positions emit 0
        return h_out, jnp.where(valid, h_new, h), jnp.where(valid, c_new, c)

    def step(s, carry):
        h_f, c_f, h_b, c_b = carry
        sr = L - 1 - s                                     # backward actual time
        # Single fused recurrent matmul for BOTH directions (block-diag W_hh).
        hcat = jnp.concatenate([h_f, h_b], axis=-1)        # (BC, 2H)
        gh = jnp.dot(hcat, whh_ref[...],
                     preferred_element_type=jnp.float32, precision=hp)   # (BC, 8H)
        ga = g_scr[pl.ds(s * BC, BC), :]                   # fwd input gates, time s
        gb = g_scr[pl.ds(sr * BC, BC), :]                  # bwd input gates, time sr
        gates_f = ga[:, :G4] + gh[:, :G4]
        gates_b = gb[:, G4:] + gh[:, G4:]
        hof, h_f, c_f = cell(gates_f, h_f, c_f, lens > s)
        hob, h_b, c_b = cell(gates_b, h_b, c_b, lens > sr)
        # Head contributions (tiny N=1 MXU dots, off the recurrence critical path):
        #   p_start mod-part:  x_t . w_mod1     -> ps_ref[time s]
        #   p_end   mod2-part: h_f . w_mod2[:H] -> pe_ref[time s]
        #                      h_b . w_mod2[H:] -> peb_scr[time sr]
        x_s = x_ref[pl.ds(s * BC, BC), :]
        ps_ref[pl.ds(s * BC, BC), :] = jnp.dot(
            x_s, w1_ref[...], preferred_element_type=jnp.float32, precision=hp)
        pe_ref[pl.ds(s * BC, BC), :] = jnp.dot(
            hof, w2f_ref[...], preferred_element_type=jnp.float32, precision=hp)
        peb_scr[pl.ds(sr * BC, BC), :] = jnp.dot(
            hob, w2b_ref[...], preferred_element_type=jnp.float32, precision=hp)
        return (h_f, c_f, h_b, c_b)

    lax.fori_loop(0, L, step, (zero, zero, zero, zero))
    pe_ref[...] = pe_ref[...] + peb_scr[...]


def _bilstm_head_contrib(mod, lengths, lstm_params, w_mod1, w_mod2,
                         num_batch_chunks=2):
    """Returns (ps_mod, pe_mod), each (B, L) f32:
       ps_mod[b,l] = mod[b,l] . w_mod1;  pe_mod[b,l] = mod2[b,l] . w_mod2."""
    B, L, D = mod.shape
    wih_cat, whh_cat, bias_cat = lstm_params              # (2H,8H),(2H,8H),(1,8H)
    H = wih_cat.shape[1] // 8

    # Batch chunks run independently ("parallel"); on v7x they map to both TCs.
    nc = num_batch_chunks if (num_batch_chunks >= 1 and B % num_batch_chunks == 0) else 1
    BC = B // nc
    LBC = L * BC

    # Arrange each chunk time-major and contiguous: (nc, L*BC, 2H).
    x_tm = jnp.transpose(mod, (1, 0, 2))                                   # (L, B, D)
    x_ck = x_tm.reshape(L, nc, BC, D).transpose(1, 0, 2, 3).reshape(nc, LBC, D)
    lens_ck = lengths.astype(jnp.int32).reshape(nc, BC, 1)

    w1 = w_mod1.reshape(D, 1).astype(jnp.float32)
    w2f = w_mod2[:H].reshape(H, 1).astype(jnp.float32)
    w2b = w_mod2[H:].reshape(H, 1).astype(jnp.float32)

    def chunk(last):
        return pl.BlockSpec((pl.Squeezed(),) + last, lambda c: (c, 0, 0))

    def full(shape):
        return pl.BlockSpec(shape, lambda c: (0,) * len(shape))

    ps, pe = pl.pallas_call(
        _bilstm_head_kernel,
        out_shape=(jax.ShapeDtypeStruct((nc, LBC, 1), jnp.float32),
                   jax.ShapeDtypeStruct((nc, LBC, 1), jnp.float32)),
        grid_spec=pltpu.PrefetchScalarGridSpec(
            num_scalar_prefetch=0,
            grid=(nc,),
            in_specs=[
                chunk((LBC, D)),                   # mod (single stream, read once)
                chunk((BC, 1)),                    # lengths
                full(wih_cat.shape), full(whh_cat.shape), full(bias_cat.shape),
                full(w1.shape), full(w2f.shape), full(w2b.shape),
            ],
            out_specs=[chunk((LBC, 1)), chunk((LBC, 1))],
            scratch_shapes=[
                pltpu.VMEM((LBC, wih_cat.shape[1]), jnp.float32),   # precomputed gates
                pltpu.VMEM((LBC, 1), jnp.float32),                  # backward pe part
            ],
        ),
        compiler_params=pltpu.CompilerParams(
            dimension_semantics=("parallel",),
            vmem_limit_bytes=40 * 1024 * 1024),
    )(x_ck, lens_ck, wih_cat, whh_cat, bias_cat, w1, w2f, w2b)

    def unscramble(y):                                   # (nc, L*BC, 1) -> (B, L)
        return y.reshape(nc, L, BC).transpose(0, 2, 1).reshape(B, L)

    return unscramble(ps), unscramble(pe)


# ---------------------------------------------------------------------------
# Kernel 2: fused start/end heads (MXU) + masked log-softmax, R rows per step.
# ---------------------------------------------------------------------------
def _head_softmax_kernel(len_ref, att_ref, ps_ref, pe_ref,
                         watt_ref, bias_ref, out_ref):
    R, L = att_ref.shape[0], att_ref.shape[1]
    B = len_ref.shape[0]
    r0 = pl.program_id(0)
    hp = jax.lax.Precision.HIGHEST
    neg = jnp.float32(-1e30)
    iota = lax.broadcasted_iota(jnp.int32, (L, 1), 0)
    eye2 = jnp.eye(2, dtype=jnp.float32)
    watt = watt_ref[...]                                  # (8H, 2)
    bias = bias_ref[...]                                  # (1, 2)

    for r in range(R):                                    # static unroll over rows
        # Both 1-wide heads as ONE MXU matmul over this row's (L, 8H) att tile.
        s = jnp.dot(att_ref[r], watt,
                    preferred_element_type=jnp.float32, precision=hp)     # (L, 2)
        s = s + jnp.concatenate([ps_ref[r], pe_ref[r]], axis=-1) + bias   # (L, 2)
        # Mask rebuilt in-kernel from scalar-prefetched lengths (no mask stream).
        length = len_ref[jnp.minimum(r0 * R + r, B - 1)]
        valid = (iota < length).astype(jnp.float32)                        # (L, 1)
        masked = valid * s + (1.0 - valid) * neg
        m = jnp.max(masked, axis=0, keepdims=True)                         # (1, 2)
        lse = jnp.log(jnp.sum(jnp.exp(masked - m), axis=0, keepdims=True)) + m
        res = masked - lse                                                 # (L, 2)
        # Lane-dense (2, L) row via an MXU identity "transpose" (contract last dims).
        res_t = lax.dot_general(eye2, res, (((1,), (1,)), ((), ())),
                                preferred_element_type=jnp.float32,
                                precision=hp)                              # (2, L)
        out_ref[r] = res_t


def _pick_rows(B, L, d_att, itemsize, budget=16 * 1024 * 1024):
    best = 1
    for r in range(1, min(B, 8) + 1):
        if B % r == 0 and 2 * r * L * d_att * itemsize <= budget:
            best = r
    return best


def _output_head(att, ps_mod, pe_mod, lengths, w_att_both, bias2):
    B, L, d_att = att.shape
    R = _pick_rows(B, L, d_att, att.dtype.itemsize)

    def rows(last):
        return pl.BlockSpec((R, L, last), lambda b, lens: (b, 0, 0))

    def full(shape):
        return pl.BlockSpec(shape, lambda b, lens: (0,) * len(shape))

    out = pl.pallas_call(
        _head_softmax_kernel,
        out_shape=jax.ShapeDtypeStruct((B, 2, L), jnp.float32),
        grid_spec=pltpu.PrefetchScalarGridSpec(
            num_scalar_prefetch=1,                       # lengths -> SMEM
            grid=(B // R,),
            in_specs=[rows(d_att), rows(1), rows(1),
                      full(w_att_both.shape), full(bias2.shape)],
            out_specs=pl.BlockSpec((R, 2, L), lambda b, lens: (b, 0, 0)),
        ),
        compiler_params=pltpu.CompilerParams(
            dimension_semantics=("parallel",),
            vmem_limit_bytes=40 * 1024 * 1024),
    )(lengths.astype(jnp.int32),
      att,                                               # native dtype, no copy
      ps_mod.reshape(B, L, 1).astype(jnp.float32),
      pe_mod.reshape(B, L, 1).astype(jnp.float32),
      w_att_both.astype(jnp.float32),
      bias2.astype(jnp.float32))
    return out[:, 0, :], out[:, 1, :]


# ---------------------------------------------------------------------------
# Full BiDAFOutput forward.
# ---------------------------------------------------------------------------
def bidaf_output_forward(att, mod, mask, params, num_batch_chunks=2):
    """att: (B, L, 8H), mod: (B, L, 2H), mask: (B, L) {0,1}."""
    lengths = jnp.sum(mask, axis=-1).astype(jnp.int32)    # pack_padded lengths

    ps_mod, pe_mod = _bilstm_head_contrib(
        mod, lengths, params["lstm"], params["w_mod1"], params["w_mod2"],
        num_batch_chunks=num_batch_chunks)

    w_att_both = jnp.stack([params["w_att1"], params["w_att2"]], axis=1)   # (8H, 2)
    bias2 = jnp.stack([params["b_att1"] + params["b_mod1"],
                       params["b_att2"] + params["b_mod2"]]).reshape(1, 2)

    return _output_head(att, ps_mod, pe_mod, lengths, w_att_both, bias2)


# ---------------------------------------------------------------------------
# Pure-JAX reference (for verification).
# ---------------------------------------------------------------------------
def _lstm_dir_ref(x, lengths, w_ih, w_hh, b_ih, b_hh, reverse):
    B, L, _ = x.shape
    H = w_hh.shape[1]
    h = jnp.zeros((B, H), jnp.float32)
    c = jnp.zeros((B, H), jnp.float32)
    outs = [None] * L
    order = range(L - 1, -1, -1) if reverse else range(L)
    hp = lax.Precision.HIGHEST
    for t in order:
        valid = (lengths > t).reshape(B, 1)
        gates = (jnp.dot(x[:, t, :], w_ih.T, precision=hp)
                 + jnp.dot(h, w_hh.T, precision=hp) + b_ih + b_hh)
        i = jax.nn.sigmoid(gates[:, :H])
        f = jax.nn.sigmoid(gates[:, H:2 * H])
        g = jnp.tanh(gates[:, 2 * H:3 * H])
        o = jax.nn.sigmoid(gates[:, 3 * H:])
        c_new = f * c + i * g
        h_new = o * jnp.tanh(c_new)
        outs[t] = jnp.where(valid, h_new, 0.0)
        h = jnp.where(valid, h_new, h)
        c = jnp.where(valid, c_new, c)
    return jnp.stack(outs, axis=1)


def _reference(att, mod, mask, params):
    mask_f = mask.astype(jnp.float32)
    lengths = jnp.sum(mask, axis=-1).astype(jnp.int32)
    p_start = (jnp.sum(att * params["w_att1"], axis=-1) + params["b_att1"]
               + jnp.sum(mod * params["w_mod1"], axis=-1) + params["b_mod1"])
    (w_ih_f, w_hh_f, b_ih_f, b_hh_f,
     w_ih_b, w_hh_b, b_ih_b, b_hh_b) = params["lstm_torch"]
    h_f = _lstm_dir_ref(mod, lengths, w_ih_f, w_hh_f, b_ih_f, b_hh_f, reverse=False)
    h_b = _lstm_dir_ref(mod, lengths, w_ih_b, w_hh_b, b_ih_b, b_hh_b, reverse=True)
    mod2 = jnp.concatenate([h_f, h_b], axis=-1)
    p_end = (jnp.sum(att * params["w_att2"], axis=-1) + params["b_att2"]
             + jnp.sum(mod2 * params["w_mod2"], axis=-1) + params["b_mod2"])

    def mls(s):
        ms = mask_f * s + (1.0 - mask_f) * (-1e30)
        return jax.nn.log_softmax(ms, axis=-1)

    return mls(p_start), mls(p_end)


if __name__ == "__main__":
    key = jax.random.PRNGKey(0)
    keys = jax.random.split(key, 16)

    B, L, H = 2, 16, 32                 # batch, seq len, hidden_size
    D_att, D_mod = 8 * H, 2 * H

    att = jax.random.normal(keys[0], (B, L, D_att), jnp.float32)
    mod = jax.random.normal(keys[1], (B, L, D_mod), jnp.float32)
    lens = jnp.array([L, L - 5], jnp.int32)
    mask = (jnp.arange(L)[None, :] < lens[:, None]).astype(jnp.int32)   # (B, L)

    s = 0.1
    w_att1 = jax.random.normal(keys[2], (D_att,), jnp.float32) * s
    w_att2 = jax.random.normal(keys[3], (D_att,), jnp.float32) * s
    w_mod1 = jax.random.normal(keys[4], (D_mod,), jnp.float32) * s
    w_mod2 = jax.random.normal(keys[5], (D_mod,), jnp.float32) * s
    b_att1 = jax.random.normal(keys[6], (), jnp.float32) * s
    b_att2 = jax.random.normal(keys[7], (), jnp.float32) * s
    b_mod1 = jax.random.normal(keys[8], (), jnp.float32) * s
    b_mod2 = jax.random.normal(keys[9], (), jnp.float32) * s

    # torch-layout LSTM params: weight_ih (4H, 2H), weight_hh (4H, H), biases (4H,)
    w_ih_f = jax.random.normal(keys[10], (4 * H, D_mod), jnp.float32) * s
    w_hh_f = jax.random.normal(keys[11], (4 * H, H), jnp.float32) * s
    b_ih_f = jax.random.normal(keys[12], (4 * H,), jnp.float32) * s
    b_hh_f = jnp.zeros((4 * H,), jnp.float32)
    w_ih_b = jax.random.normal(keys[13], (4 * H, D_mod), jnp.float32) * s
    w_hh_b = jax.random.normal(keys[14], (4 * H, H), jnp.float32) * s
    b_ih_b = jax.random.normal(keys[15], (4 * H,), jnp.float32) * s
    b_hh_b = jnp.zeros((4 * H,), jnp.float32)

    # Kernel layout: input projection (2H, 8H) = [W_ih_f^T | W_ih_b^T];
    # recurrent (2H, 8H) = block-diag(W_hh_f^T, W_hh_b^T); bias (1, 8H).
    wih_cat = jnp.concatenate([w_ih_f.T, w_ih_b.T], axis=1)
    whh_cat = jnp.zeros((D_mod, 8 * H), jnp.float32)
    whh_cat = whh_cat.at[:H, :4 * H].set(w_hh_f.T)
    whh_cat = whh_cat.at[H:, 4 * H:].set(w_hh_b.T)
    bias_cat = jnp.concatenate([b_ih_f + b_hh_f, b_ih_b + b_hh_b]).reshape(1, 8 * H)

    params = {
        "w_att1": w_att1, "w_att2": w_att2,
        "w_mod1": w_mod1, "w_mod2": w_mod2,
        "b_att1": b_att1, "b_att2": b_att2,
        "b_mod1": b_mod1, "b_mod2": b_mod2,
        "lstm": (wih_cat, whh_cat, bias_cat),
        "lstm_torch": (w_ih_f, w_hh_f, b_ih_f, b_hh_f,
                       w_ih_b, w_hh_b, b_ih_b, b_hh_b),
    }

    log_p_start, log_p_end = bidaf_output_forward(att, mod, mask, params)
    log_p_start = jax.block_until_ready(log_p_start)
    log_p_end = jax.block_until_ready(log_p_end)

    ref_start, ref_end = _reference(att, mod, mask, params)

    assert log_p_start.shape == (B, L) and log_p_end.shape == (B, L)
    # Compare at valid (unmasked) positions; masked positions are ~-1e30 in both.
    valid = mask.astype(bool)
    assert jnp.allclose(jnp.where(valid, log_p_start, 0.0),
                        jnp.where(valid, ref_start, 0.0),
                        atol=5e-3, rtol=5e-3), "log_p_start mismatch vs reference"
    assert jnp.allclose(jnp.where(valid, log_p_end, 0.0),
                        jnp.where(valid, ref_end, 0.0),
                        atol=5e-3, rtol=5e-3), "log_p_end mismatch vs reference"

    print("KERNEL_OK")
</pallas_src>

<mosaic_0001>
module attributes {stable_mosaic.version = 11 : i64} {
  func.func @_bilstm_head_kernel(%arg0: i32, %arg1: memref<1x16x64xf32, #tpu.memory_space<vmem>>, %arg2: memref<1x1x1xi32, #tpu.memory_space<vmem>>, %arg3: memref<64x256xf32, #tpu.memory_space<vmem>>, %arg4: memref<64x256xf32, #tpu.memory_space<vmem>>, %arg5: memref<1x256xf32, #tpu.memory_space<vmem>>, %arg6: memref<64x1xf32, #tpu.memory_space<vmem>>, %arg7: memref<32x1xf32, #tpu.memory_space<vmem>>, %arg8: memref<32x1xf32, #tpu.memory_space<vmem>>, %arg9: memref<1x16x1xf32, #tpu.memory_space<vmem>>, %arg10: memref<1x16x1xf32, #tpu.memory_space<vmem>>, %arg11: memref<16x256xf32, #tpu.memory_space<vmem>>, %arg12: memref<16x1xf32, #tpu.memory_space<vmem>>) attributes {dimension_semantics = [#tpu.dimension_semantics<parallel>], iteration_bounds = array<i64: 2>, scalar_prefetch = 0 : i64, scratch_operands = 2 : i64, tpu.core_type = #tpu.core_type<tc>, window_params = [{transform_indices = @transform_0, window_bounds = array<i64: 1, 16, 64>}, {transform_indices = @transform_1, window_bounds = array<i64: 1, 1, 1>}, {pipeline_mode = #tpu.pipeline_mode<synchronous>, transform_indices = @transform_2, window_bounds = array<i64: 64, 256>}, {pipeline_mode = #tpu.pipeline_mode<synchronous>, transform_indices = @transform_3, window_bounds = array<i64: 64, 256>}, {pipeline_mode = #tpu.pipeline_mode<synchronous>, transform_indices = @transform_4, window_bounds = array<i64: 1, 256>}, {pipeline_mode = #tpu.pipeline_mode<synchronous>, transform_indices = @transform_5, window_bounds = array<i64: 64, 1>}, {pipeline_mode = #tpu.pipeline_mode<synchronous>, transform_indices = @transform_6, window_bounds = array<i64: 32, 1>}, {pipeline_mode = #tpu.pipeline_mode<synchronous>, transform_indices = @transform_7, window_bounds = array<i64: 32, 1>}, {transform_indices = @transform_8, window_bounds = array<i64: 1, 16, 1>}, {transform_indices = @transform_9, window_bounds = array<i64: 1, 16, 1>}]} {
    %c0 = arith.constant 0 : index
    %c0_0 = arith.constant 0 : index
    %c0_1 = arith.constant 0 : index
    %0 = vector.load %arg1[%c0, %c0_0, %c0_1] : memref<1x16x64xf32, #tpu.memory_space<vmem>>, vector<1x16x64xf32>
    %1 = vector.shape_cast %0 : vector<1x16x64xf32> to vector<16x64xf32>
    %c0_2 = arith.constant 0 : index
    %c0_3 = arith.constant 0 : index
    %2 = vector.load %arg3[%c0_2, %c0_3] : memref<64x256xf32, #tpu.memory_space<vmem>>, vector<64x256xf32>
    %cst = arith.constant dense<0.000000e+00> : vector<16x256xf32>
    %3 = tpu.matmul %1, %2, %cst {dimension_numbers = #tpu.dot_dimension_numbers<[1], [0], [0], [1], [0, 0, 1, 1], [], []>, precision = #tpu.contract_precision<fp32>} : vector<16x64xf32>, vector<64x256xf32>, vector<16x256xf32> -> vector<16x256xf32>
    %c0_4 = arith.constant 0 : index
    %c0_5 = arith.constant 0 : index
    %4 = vector.load %arg5[%c0_4, %c0_5] : memref<1x256xf32, #tpu.memory_space<vmem>>, vector<1x256xf32>
    %5 = vector.broadcast %4 : vector<1x256xf32> to vector<16x256xf32>
    %6 = arith.addf %3, %5 : vector<16x256xf32>
    %c0_6 = arith.constant 0 : index
    %c0_7 = arith.constant 0 : index
    %7 = vector.load %arg11[%c0_6, %c0_7] : memref<16x256xf32, #tpu.memory_space<vmem>>, vector<16x256xf32>
    tpu.vector_store %arg11[%c0_6, %c0_7], %6 {strides = array<i32>} : memref<16x256xf32, #tpu.memory_space<vmem>>, vector<16x256xf32>,
    %c0_8 = arith.constant 0 : index
    %c0_9 = arith.constant 0 : index
    %c0_10 = arith.constant 0 : index
    %8 = vector.load %arg2[%c0_8, %c0_9, %c0_10] : memref<1x1x1xi32, #tpu.memory_space<vmem>>, vector<1x1x1xi32>
    %9 = vector.shape_cast %8 : vector<1x1x1xi32> to vector<1x1xi32>
    %cst_11 = arith.constant 0.000000e+00 : f32
    %10 = vector.broadcast %cst_11 : f32 to vector<1x32xf32>
    %c0_i32 = arith.constant 0 : i32
    %c16_i32 = arith.constant 16 : i32
    %11 = arith.addi %c0_i32, %c16_i32 : i32
    %c1_i32 = arith.constant 1 : i32
    %12:4 = scf.for %arg13 = %c0_i32 to %11 step %c1_i32 iter_args(%arg14 = %10, %arg15 = %10, %arg16 = %10, %arg17 = %10) -> (vector<1x32xf32>, vector<1x32xf32>, vector<1x32xf32>, vector<1x32xf32>)  : i32 {
      %c15_i32 = arith.constant 15 : i32
      %20 = arith.subi %c15_i32, %arg13 : i32
      %21 = tpu.concatenate %arg14, %arg16 in 1 : vector<1x32xf32>, vector<1x32xf32> -> vector<1x64xf32>
      %c0_21 = arith.constant 0 : index
      %c0_22 = arith.constant 0 : index
      %22 = vector.load %arg4[%c0_21, %c0_22] : memref<64x256xf32, #tpu.memory_space<vmem>>, vector<64x256xf32>
      %cst_23 = arith.constant dense<0.000000e+00> : vector<1x256xf32>
      %23 = tpu.matmul %21, %22, %cst_23 {dimension_numbers = #tpu.dot_dimension_numbers<[1], [0], [0], [1], [0, 0, 1, 1], [], []>, precision = #tpu.contract_precision<fp32>} : vector<1x64xf32>, vector<64x256xf32>, vector<1x256xf32> -> vector<1x256xf32>
      %c1_i32_24 = arith.constant 1 : i32
      %24 = arith.muli %arg13, %c1_i32_24 : i32
      %25 = arith.index_cast %24 : i32 to index
      %c0_25 = arith.constant 0 : index
      %26 = vector.load %arg11[%25, %c0_25] : memref<16x256xf32, #tpu.memory_space<vmem>>, vector<1x256xf32>
      %c1_i32_26 = arith.constant 1 : i32
      %27 = arith.muli %20, %c1_i32_26 : i32
      %28 = arith.index_cast %27 : i32 to index
      %c0_27 = arith.constant 0 : index
      %29 = vector.load %arg11[%28, %c0_27] : memref<16x256xf32, #tpu.memory_space<vmem>>, vector<1x256xf32>
      %30 = vector.extract_strided_slice %26 {offsets = [0, 0], sizes = [1, 128], strides = [1, 1]} : vector<1x256xf32> to vector<1x128xf32>
      %31 = vector.extract_strided_slice %23 {offsets = [0, 0], sizes = [1, 128], strides = [1, 1]} : vector<1x256xf32> to vector<1x128xf32>
      %32 = arith.addf %30, %31 : vector<1x128xf32>
      %33 = vector.extract_strided_slice %29 {offsets = [0, 128], sizes = [1, 128], strides = [1, 1]} : vector<1x256xf32> to vector<1x128xf32>
      %34 = vector.extract_strided_slice %23 {offsets = [0, 128], sizes = [1, 128], strides = [1, 1]} : vector<1x256xf32> to vector<1x128xf32>
      %35 = arith.addf %33, %34 : vector<1x128xf32>
      %36 = vector.broadcast %arg13 : i32 to vector<1x1xi32>
      %37 = arith.cmpi sgt, %9, %36 : vector<1x1xi32>
      %38 = vector.extract_strided_slice %32 {offsets = [0, 0], sizes = [1, 32], strides = [1, 1]} : vector<1x128xf32> to vector<1x32xf32>
      %39 = arith.negf %38 : vector<1x32xf32>
      %40 = math.exp %39 : vector<1x32xf32>
      %cst_28 = arith.constant 1.000000e+00 : f32
      %41 = vector.broadcast %cst_28 : f32 to vector<1x32xf32>
      %42 = arith.addf %41, %40 : vector<1x32xf32>
      %43 = arith.divf %41, %42 : vector<1x32xf32>
      %44 = vector.extract_strided_slice %32 {offsets = [0, 32], sizes = [1, 32], strides = [1, 1]} : vector<1x128xf32> to vector<1x32xf32>
      %45 = arith.negf %44 : vector<1x32xf32>
      %46 = math.exp %45 : vector<1x32xf32>
      %cst_29 = arith.constant 1.000000e+00 : f32
      %47 = vector.broadcast %cst_29 : f32 to vector<1x32xf32>
      %48 = arith.addf %47, %46 : vector<1x32xf32>
      %49 = arith.divf %47, %48 : vector<1x32xf32>
      %50 = vector.extract_strided_slice %32 {offsets = [0, 64], sizes = [1, 32], strides = [1, 1]} : vector<1x128xf32> to vector<1x32xf32>
      %51 = math.tanh %50 : vector<1x32xf32>
      %52 = vector.extract_strided_slice %32 {offsets = [0, 96], sizes = [1, 32], strides = [1, 1]} : vector<1x128xf32> to vector<1x32xf32>
      %53 = arith.negf %52 : vector<1x32xf32>
      %54 = math.exp %53 : vector<1x32xf32>
      %cst_30 = arith.constant 1.000000e+00 : f32
      %55 = vector.broadcast %cst_30 : f32 to vector<1x32xf32>
      %56 = arith.addf %55, %54 : vector<1x32xf32>
      %57 = arith.divf %55, %56 : vector<1x32xf32>
      %58 = arith.mulf %49, %arg15 : vector<1x32xf32>
      %59 = arith.mulf %43, %51 : vector<1x32xf32>
      %60 = arith.addf %58, %59 : vector<1x32xf32>
      %61 = math.tanh %60 : vector<1x32xf32>
      %62 = arith.mulf %57, %61 : vector<1x32xf32>
      %cst_31 = arith.constant 0.000000e+00 : f32
      %63 = vector.shape_cast %37 : vector<1x1xi1> to vector<1x1xi1>
      %64 = vector.broadcast %63 : vector<1x1xi1> to vector<1x32xi1>
      %65 = vector.broadcast %cst_31 : f32 to vector<1x32xf32>
      %66 = arith.select %64, %62, %65 : vector<1x32xi1>, vector<1x32xf32>
      %67 = vector.shape_cast %37 : vector<1x1xi1> to vector<1x1xi1>
      %68 = vector.broadcast %67 : vector<1x1xi1> to vector<1x32xi1>
      %69 = arith.select %68, %62, %arg14 : vector<1x32xi1>, vector<1x32xf32>
      %70 = vector.shape_cast %37 : vector<1x1xi1> to vector<1x1xi1>
      %71 = vector.broadcast %70 : vector<1x1xi1> to vector<1x32xi1>
      %72 = arith.select %71, %60, %arg15 : vector<1x32xi1>, vector<1x32xf32>
      %73 = vector.broadcast %20 : i32 to vector<1x1xi32>
      %74 = arith.cmpi sgt, %9, %73 : vector<1x1xi32>
      %75 = vector.extract_strided_slice %35 {offsets = [0, 0], sizes = [1, 32], strides = [1, 1]} : vector<1x128xf32> to vector<1x32xf32>
      %76 = arith.negf %75 : vector<1x32xf32>
      %77 = math.exp %76 : vector<1x32xf32>
      %cst_32 = arith.constant 1.000000e+00 : f32
      %78 = vector.broadcast %cst_32 : f32 to vector<1x32xf32>
      %79 = arith.addf %78, %77 : vector<1x32xf32>
      %80 = arith.divf %78, %79 : vector<1x32xf32>
      %81 = vector.extract_strided_slice %35 {offsets = [0, 32], sizes = [1, 32], strides = [1, 1]} : vector<1x128xf32> to vector<1x32xf32>
      %82 = arith.negf %81 : vector<1x32xf32>
      %83 = math.exp %82 : vector<1x32xf32>
      %cst_33 = arith.constant 1.000000e+00 : f32
      %84 = vector.broadcast %cst_33 : f32 to vector<1x32xf32>
      %85 = arith.addf %84, %83 : vector<1x32xf32>
      %86 = arith.divf %84, %85 : vector<1x32xf32>
      %87 = vector.extract_strided_slice %35 {offsets = [0, 64], sizes = [1, 32], strides = [1, 1]} : vector<1x128xf32> to vector<1x32xf32>
      %88 = math.tanh %87 : vector<1x32xf32>
      %89 = vector.extract_strided_slice %35 {offsets = [0, 96], sizes = [1, 32], strides = [1, 1]} : vector<1x128xf32> to vector<1x32xf32>
      %90 = arith.negf %89 : vector<1x32xf32>
      %91 = math.exp %90 : vector<1x32xf32>
      %cst_34 = arith.constant 1.000000e+00 : f32
      %92 = vector.broadcast %cst_34 : f32 to vector<1x32xf32>
      %93 = arith.addf %92, %91 : vector<1x32xf32>
      %94 = arith.divf %92, %93 : vector<1x32xf32>
      %95 = arith.mulf %86, %arg17 : vector<1x32xf32>
      %96 = arith.mulf %80, %88 : vector<1x32xf32>
      %97 = arith.addf %95, %96 : vector<1x32xf32>
      %98 = math.tanh %97 : vector<1x32xf32>
      %99 = arith.mulf %94, %98 : vector<1x32xf32>
      %cst_35 = arith.constant 0.000000e+00 : f32
      %100 = vector.shape_cast %74 : vector<1x1xi1> to vector<1x1xi1>
      %101 = vector.broadcast %100 : vector<1x1xi1> to vector<1x32xi1>
      %102 = vector.broadcast %cst_35 : f32 to vector<1x32xf32>
      %103 = arith.select %101, %99, %102 : vector<1x32xi1>, vector<1x32xf32>
      %104 = vector.shape_cast %74 : vector<1x1xi1> to vector<1x1xi1>
      %105 = vector.broadcast %104 : vector<1x1xi1> to vector<1x32xi1>
      %106 = arith.select %105, %99, %arg16 : vector<1x32xi1>, vector<1x32xf32>
      %107 = vector.shape_cast %74 : vector<1x1xi1> to vector<1x1xi1>
      %108 = vector.broadcast %107 : vector<1x1xi1> to vector<1x32xi1>
      %109 = arith.select %108, %97, %arg17 : vector<1x32xi1>, vector<1x32xf32>
      %c1_i32_36 = arith.constant 1 : i32
      %110 = arith.muli %arg13, %c1_i32_36 : i32
      %c0_37 = arith.constant 0 : index
      %111 = arith.index_cast %110 : i32 to index
      %c0_38 = arith.constant 0 : index
      %112 = vector.load %arg1[%c0_37, %111, %c0_38] : memref<1x16x64xf32, #tpu.memory_space<vmem>>, vector<1x1x64xf32>
      %113 = vector.shape_cast %112 : vector<1x1x64xf32> to vector<1x64xf32>
      %c0_39 = arith.constant 0 : index
      %c0_40 = arith.constant 0 : index
      %114 = vector.load %arg6[%c0_39, %c0_40] : memref<64x1xf32, #tpu.memory_space<vmem>>, vector<64x1xf32>
      %cst_41 = arith.constant dense<0.000000e+00> : vector<1x1xf32>
      %115 = tpu.matmul %113, %114, %cst_41 {dimension_numbers = #tpu.dot_dimension_numbers<[1], [0], [0], [1], [0, 0, 1, 1], [], []>, precision = #tpu.contract_precision<fp32>} : vector<1x64xf32>, vector<64x1xf32>, vector<1x1xf32> -> vector<1x1xf32>
      %c1_i32_42 = arith.constant 1 : i32
      %116 = arith.muli %arg13, %c1_i32_42 : i32
      %c0_43 = arith.constant 0 : index
      %117 = arith.index_cast %116 : i32 to index
      %c0_44 = arith.constant 0 : index
      %118 = vector.load %arg9[%c0_43, %117, %c0_44] : memref<1x16x1xf32, #tpu.memory_space<vmem>>, vector<1x1x1xf32>
      %119 = vector.shape_cast %118 : vector<1x1x1xf32> to vector<1x1xf32>
      %120 = vector.shape_cast %115 : vector<1x1xf32> to vector<1x1x1xf32>
      tpu.vector_store %arg9[%c0_43, %117, %c0_44], %120 {strides = array<i32>} : memref<1x16x1xf32, #tpu.memory_space<vmem>>, vector<1x1x1xf32>,
      %c0_45 = arith.constant 0 : index
      %c0_46 = arith.constant 0 : index
      %121 = vector.load %arg7[%c0_45, %c0_46] : memref<32x1xf32, #tpu.memory_space<vmem>>, vector<32x1xf32>
      %cst_47 = arith.constant dense<0.000000e+00> : vector<1x1xf32>
      %122 = tpu.matmul %66, %121, %cst_47 {dimension_numbers = #tpu.dot_dimension_numbers<[1], [0], [0], [1], [0, 0, 1, 1], [], []>, precision = #tpu.contract_precision<fp32>} : vector<1x32xf32>, vector<32x1xf32>, vector<1x1xf32> -> vector<1x1xf32>
      %c1_i32_48 = arith.constant 1 : i32
      %123 = arith.muli %arg13, %c1_i32_48 : i32
      %c0_49 = arith.constant 0 : index
      %124 = arith.index_cast %123 : i32 to index
      %c0_50 = arith.constant 0 : index
      %125 = vector.load %arg10[%c0_49, %124, %c0_50] : memref<1x16x1xf32, #tpu.memory_space<vmem>>, vector<1x1x1xf32>
      %126 = vector.shape_cast %125 : vector<1x1x1xf32> to vector<1x1xf32>
      %127 = vector.shape_cast %122 : vector<1x1xf32> to vector<1x1x1xf32>
      tpu.vector_store %arg10[%c0_49, %124, %c0_50], %127 {strides = array<i32>} : memref<1x16x1xf32, #tpu.memory_space<vmem>>, vector<1x1x1xf32>,
      %c0_51 = arith.constant 0 : index
      %c0_52 = arith.constant 0 : index
      %128 = vector.load %arg8[%c0_51, %c0_52] : memref<32x1xf32, #tpu.memory_space<vmem>>, vector<32x1xf32>
      %cst_53 = arith.constant dense<0.000000e+00> : vector<1x1xf32>
      %129 = tpu.matmul %103, %128, %cst_53 {dimension_numbers = #tpu.dot_dimension_numbers<[1], [0], [0], [1], [0, 0, 1, 1], [], []>, precision = #tpu.contract_precision<fp32>} : vector<1x32xf32>, vector<32x1xf32>, vector<1x1xf32> -> vector<1x1xf32>
      %c1_i32_54 = arith.constant 1 : i32
      %130 = arith.muli %20, %c1_i32_54 : i32
      %131 = arith.index_cast %130 : i32 to index
      %c0_55 = arith.constant 0 : index
      %132 = vector.load %arg12[%131, %c0_55] : memref<16x1xf32, #tpu.memory_space<vmem>>, vector<1x1xf32>
      tpu.vector_store %arg12[%131, %c0_55], %129 {strides = array<i32>} : memref<16x1xf32, #tpu.memory_space<vmem>>, vector<1x1xf32>,
      scf.yield %69, %72, %106, %109 : vector<1x32xf32>, vector<1x32xf32>, vector<1x32xf32>, vector<1x32xf32>
    }
    %c16_i32_12 = arith.constant 16 : i32
    %c0_13 = arith.constant 0 : index
    %c0_14 = arith.constant 0 : index
    %c0_15 = arith.constant 0 : index
    %13 = vector.load %arg10[%c0_13, %c0_14, %c0_15] : memref<1x16x1xf32, #tpu.memory_space<vmem>>, vector<1x16x1xf32>
    %14 = vector.shape_cast %13 : vector<1x16x1xf32> to vector<16x1xf32>
    %c0_16 = arith.constant 0 : index
    %c0_17 = arith.constant 0 : index
    %15 = vector.load %arg12[%c0_16, %c0_17] : memref<16x1xf32, #tpu.memory_space<vmem>>, vector<16x1xf32>
    %16 = arith.addf %14, %15 : vector<16x1xf32>
    %c0_18 = arith.constant 0 : index
    %c0_19 = arith.constant 0 : index
    %c0_20 = arith.constant 0 : index
    %17 = vector.load %arg10[%c0_18, %c0_19, %c0_20] : memref<1x16x1xf32, #tpu.memory_space<vmem>>, vector<1x16x1xf32>
    %18 = vector.shape_cast %17 : vector<1x16x1xf32> to vector<16x1xf32>
    %19 = vector.shape_cast %16 : vector<16x1xf32> to vector<1x16x1xf32>
    tpu.vector_store %arg10[%c0_18, %c0_19, %c0_20], %19 {strides = array<i32>} : memref<1x16x1xf32, #tpu.memory_space<vmem>>, vector<1x16x1xf32>,
    return
  }
  func.func @transform_0(%arg0: i32) -> (i32, i32, i32) {
    %c0_i32 = arith.constant 0 : i32
    %c0_i32_0 = arith.constant 0 : i32
    %c0_i32_1 = arith.constant 0 : i32
    return %arg0, %c0_i32, %c0_i32_0 : i32, i32, i32
  }
  func.func @transform_1(%arg0: i32) -> (i32, i32, i32) {
    %c0_i32 = arith.constant 0 : i32
    %c0_i32_0 = arith.constant 0 : i32
    %c0_i32_1 = arith.constant 0 : i32
    return %arg0, %c0_i32, %c0_i32_0 : i32, i32, i32
  }
  func.func @transform_2(%arg0: i32) -> (i32, i32) {
    %c0_i32 = arith.constant 0 : i32
    %c0_i32_0 = arith.constant 0 : i32
    %c0_i32_1 = arith.constant 0 : i32
    return %c0_i32, %c0_i32_0 : i32, i32
  }
  func.func @transform_3(%arg0: i32) -> (i32, i32) {
    %c0_i32 = arith.constant 0 : i32
    %c0_i32_0 = arith.constant 0 : i32
    %c0_i32_1 = arith.constant 0 : i32
    return %c0_i32, %c0_i32_0 : i32, i32
  }
  func.func @transform_4(%arg0: i32) -> (i32, i32) {
    %c0_i32 = arith.constant 0 : i32
    %c0_i32_0 = arith.constant 0 : i32
    %c0_i32_1 = arith.constant 0 : i32
    return %c0_i32, %c0_i32_0 : i32, i32
  }
  func.func @transform_5(%arg0: i32) -> (i32, i32) {
    %c0_i32 = arith.constant 0 : i32
    %c0_i32_0 = arith.constant 0 : i32
    %c0_i32_1 = arith.constant 0 : i32
    return %c0_i32, %c0_i32_0 : i32, i32
  }
  func.func @transform_6(%arg0: i32) -> (i32, i32) {
    %c0_i32 = arith.constant 0 : i32
    %c0_i32_0 = arith.constant 0 : i32
    %c0_i32_1 = arith.constant 0 : i32
    return %c0_i32, %c0_i32_0 : i32, i32
  }
  func.func @transform_7(%arg0: i32) -> (i32, i32) {
    %c0_i32 = arith.constant 0 : i32
    %c0_i32_0 = arith.constant 0 : i32
    %c0_i32_1 = arith.constant 0 : i32
    return %c0_i32, %c0_i32_0 : i32, i32
  }
  func.func @transform_8(%arg0: i32) -> (i32, i32, i32) {
    %c0_i32 = arith.constant 0 : i32
    %c0_i32_0 = arith.constant 0 : i32
    %c0_i32_1 = arith.constant 0 : i32
    return %arg0, %c0_i32, %c0_i32_0 : i32, i32, i32
  }
  func.func @transform_9(%arg0: i32) -> (i32, i32, i32) {
    %c0_i32 = arith.constant 0 : i32
    %c0_i32_0 = arith.constant 0 : i32
    %c0_i32_1 = arith.constant 0 : i32
    return %arg0, %c0_i32, %c0_i32_0 : i32, i32, i32
  }
}

</mosaic_0001>

<llo_original>
// kernel: tpu_custom_call.1
$region0: #{tpu_custom_call.1}
  #allocation0 [shape = 'u32[]', space=smem, size = 0x4, offset = 0x4, fixed_abs, tag = 'smem constant byte address 0x4 - core index']
  #allocation1 [shape = 'u32[72,128]{1,0:T(1,128)}', space=vmem, size = 0x9000, scoped, tag = 'internal scratch']
  #allocation2 [shape = 'f32[16,256]{1,0:T(8,128)}', space=vmem, size = 0x4000, scoped, tag = 'scratch operand']
  #allocation3 [shape = 'f32[16,1]{1,0:T(8,128)}', space=vmem, size = 0x2000, scoped, tag = 'scratch operand']
  %s0 = inlined_call_operand.vmem [shape: f32[2,16,64], index: 0, kind: input, shape index: {}]
  %s1 = inlined_call_operand.vmem [shape: s32[2,1,1], index: 1, kind: input, shape index: {}]
  %s2 = inlined_call_operand.hbm [shape: f32[64,256], index: 2, kind: input, shape index: {}]
  %s3 = inlined_call_operand.hbm [shape: f32[64,256], index: 3, kind: input, shape index: {}]
  %s4 = inlined_call_operand.vmem [shape: f32[1,256], index: 4, kind: input, shape index: {}]
  %s5 = inlined_call_operand.vmem [shape: f32[64,1], index: 5, kind: input, shape index: {}]
  %s6 = inlined_call_operand.vmem [shape: f32[32,1], index: 6, kind: input, shape index: {}]
  %s7 = inlined_call_operand.vmem [shape: f32[32,1], index: 7, kind: input, shape index: {}]
  %s8 = inlined_call_operand.vmem [shape: f32[2,16,1], index: 8, kind: output, shape index: {0}]
  %s9 = inlined_call_operand.vmem [shape: f32[2,16,1], index: 9, kind: output, shape index: {1}]
  %10 = xla_tuple %s8, %s9
  %s11 = sld [smem:[#allocation0]]
  $region88: #{tpu_custom_call.1} parent=0
    _
  %s13 = ssub.s32 1, %s11
  %s14 = scalar_select 0, %s13, %s11
  $region1: #{tpu_custom_call.1} parent=0
    #allocation4 [shape = 'u8[65536]{0}', space=vmem, size = 0x10000, scoped, tag = 'input window, operand 2, single buffered']
    #allocation5 [shape = 's32[2]{0}', space=sflag, size = 0x8, scoped, tag = 'scoped memory for tpu_custom_call.1']
    #allocation6 [shape = 'u8[65536]{0}', space=vmem, size = 0x10000, scoped, tag = 'input window, operand 3, single buffered']
    #allocation7 [shape = 's32[1]{0}', space=sflag, size = 0x4, scoped, tag = 'scoped memory for tpu_custom_call.1']
    %15 = vsyncpa [#allocation5], 0
    %16 = vsyncpa [#allocation7], 0
    loop: start=0, step=1, limit=4
    $region2: #{tpu_custom_call.1} parent=1 // loop_pre_header
      _
    $region3: #{tpu_custom_call.1} parent=1 // loop_header
      %s18 = sphi 0, %s22
      %p19 = scmp.ge.s32.totalorder %s18, 4
      %s28 = sphi 0, %s30
      %s31 = sphi 0, %s28
      %s32 = sphi 0, %s31
      %s48 = sphi 0, %s32
      %s54 = sphi 0, %s56
      %s57 = sphi 0, %s54
      %s58 = sphi 0, %s57
      %s74 = sphi 0, %s58
      %s78 = sphi 0, %s78
      %s80 = sphi 0, %s78
      %s81 = sphi 0, %s80
      %s95 = sphi 0, %s81
      %s99 = sphi 0, %s99
      %s101 = sphi 0, %s99
      %s102 = sphi 0, %s101
      %s116 = sphi 0, %s102
      %s120 = sphi 0, %s120
      %s122 = sphi 0, %s120
      %s123 = sphi 0, %s122
      %s137 = sphi 0, %s123
      %s141 = sphi 0, %s141
      %s143 = sphi 0, %s141
      %s144 = sphi 0, %s143
      %s158 = sphi 0, %s144
      %s162 = sphi 0, %s162
      %s164 = sphi 0, %s162
      %s165 = sphi 0, %s164
      %s179 = sphi 0, %s165
      %s183 = sphi 0, %s183
      %s185 = sphi 0, %s183
      %s186 = sphi 0, %s185
      %s200 = sphi 0, %s186
      %s206 = sphi 0, %s208
      %s209 = sphi 0, %s206
      %s210 = sphi 0, %s209
      %s226 = sphi 0, %s210
      %s232 = sphi 0, %s234
      %s235 = sphi 0, %s232
      %s236 = sphi 0, %s235
      %s252 = sphi 0, %s236
    $region4: #{tpu_custom_call.1} parent=1 // loop_header_branch
      %21 = sbr.rel (%p19) target = $region8
    $region5: #{tpu_custom_call.1} parent=1 // loop_body
      %s23 = ssub.s32 %s18, 1
      %s24 = ssub.s32 %s18, 2
      %s25 = sadd.s32 %s18, 1
      %s26 = ssub.s32 %s18, %s25
      %p27 = scmp.eq.s32.totalorder %s26, 0
      %s29 = sadd.s32 %s28, 1
      %s30 = scalar_select %p27, %s28, %s29
      %p33 = pneg %p27
      %p34 = scmp.eq.s32.totalorder %s18, 1
      %p35 = por %p33, %p34
      %p36 = scmp.ne.s32.totalorder %s28, %s31
      %p37 = scmp.eq.s32.totalorder %s18, 0
      %p38 = por %p36, %p37
      %p39 = scmp.ne.s32.totalorder %s28, %s31
      %p40 = scmp.eq.s32.totalorder %s23, 1
      %p41 = por %p39, %p40
      %p42 = scmp.ne.s32.totalorder %s31, %s32
      %p43 = scmp.eq.s32.totalorder %s23, 0
      %p44 = por %p42, %p43
      %p45 = scmp.ne.s32.totalorder %s31, %s32
      %p46 = scmp.eq.s32.totalorder %s24, 1
      %p47 = por %p45, %p46
      %p49 = scmp.ne.s32.totalorder %s32, %s48
      %p50 = scmp.eq.s32.totalorder %s24, 0
      %p51 = por %p49, %p50
      %s52 = ssub.s32 %s18, %s25
      %p53 = scmp.eq.s32.totalorder %s52, 0
      %s55 = sadd.s32 %s54, 1
      %s56 = scalar_select %p53, %s54, %s55
      %p59 = pneg %p53
      %p60 = scmp.eq.s32.totalorder %s18, 1
      %p61 = por %p59, %p60
      %p62 = scmp.ne.s32.totalorder %s54, %s57
      %p63 = scmp.eq.s32.totalorder %s18, 0
      %p64 = por %p62, %p63
      %p65 = scmp.ne.s32.totalorder %s54, %s57
      %p66 = scmp.eq.s32.totalorder %s23, 1
      %p67 = por %p65, %p66
      %p68 = scmp.ne.s32.totalorder %s57, %s58
      %p69 = scmp.eq.s32.totalorder %s23, 0
      %p70 = por %p68, %p69
      %p71 = scmp.ne.s32.totalorder %s57, %s58
      %p72 = scmp.eq.s32.totalorder %s24, 1
      %p73 = por %p71, %p72
      %p75 = scmp.ne.s32.totalorder %s58, %s74
      %p76 = scmp.eq.s32.totalorder %s24, 0
      %p77 = por %p75, %p76
      %s79 = sadd.s32 %s78, 1
      %p82 = scmp.eq.s32.totalorder %s18, 1
      %p83 = scmp.ne.s32.totalorder %s78, %s80
      %p84 = scmp.eq.s32.totalorder %s18, 0
      %p85 = por %p83, %p84
      %p86 = scmp.ne.s32.totalorder %s78, %s80
      %p87 = scmp.eq.s32.totalorder %s23, 1
      %p88 = por %p86, %p87
      %p89 = scmp.ne.s32.totalorder %s80, %s81
      %p90 = scmp.eq.s32.totalorder %s23, 0
      %p91 = por %p89, %p90
      %p92 = scmp.ne.s32.totalorder %s80, %s81
      %p93 = scmp.eq.s32.totalorder %s24, 1
      %p94 = por %p92, %p93
      %p96 = scmp.ne.s32.totalorder %s81, %s95
      %p97 = scmp.eq.s32.totalorder %s24, 0
      %p98 = por %p96, %p97
      %s100 = sadd.s32 %s99, 1
      %p103 = scmp.eq.s32.totalorder %s18, 1
      %p104 = scmp.ne.s32.totalorder %s99, %s101
      %p105 = scmp.eq.s32.totalorder %s18, 0
      %p106 = por %p104, %p105
      %p107 = scmp.ne.s32.totalorder %s99, %s101
      %p108 = scmp.eq.s32.totalorder %s23, 1
      %p109 = por %p107, %p108
      %p110 = scmp.ne.s32.totalorder %s101, %s102
      %p111 = scmp.eq.s32.totalorder %s23, 0
      %p112 = por %p110, %p111
      %p113 = scmp.ne.s32.totalorder %s101, %s102
      %p114 = scmp.eq.s32.totalorder %s24, 1
      %p115 = por %p113, %p114
      %p117 = scmp.ne.s32.totalorder %s102, %s116
      %p118 = scmp.eq.s32.totalorder %s24, 0
      %p119 = por %p117, %p118
      %s121 = sadd.s32 %s120, 1
      %p124 = scmp.eq.s32.totalorder %s18, 1
      %p125 = scmp.ne.s32.totalorder %s120, %s122
      %p126 = scmp.eq.s32.totalorder %s18, 0
      %p127 = por %p125, %p126
      %p128 = scmp.ne.s32.totalorder %s120, %s122
      %p129 = scmp.eq.s32.totalorder %s23, 1
      %p130 = por %p128, %p129
      %p131 = scmp.ne.s32.totalorder %s122, %s123
      %p132 = scmp.eq.s32.totalorder %s23, 0
      %p133 = por %p131, %p132
      %p134 = scmp.ne.s32.totalorder %s122, %s123
      %p135 = scmp.eq.s32.totalorder %s24, 1
      %p136 = por %p134, %p135
      %p138 = scmp.ne.s32.totalorder %s123, %s137
      %p139 = scmp.eq.s32.totalorder %s24, 0
      %p140 = por %p138, %p139
      %s142 = sadd.s32 %s141, 1
      %p145 = scmp.eq.s32.totalorder %s18, 1
      %p146 = scmp.ne.s32.totalorder %s141, %s143
      %p147 = scmp.eq.s32.totalorder %s18, 0
      %p148 = por %p146, %p147
      %p149 = scmp.ne.s32.totalorder %s141, %s143
      %p150 = scmp.eq.s32.totalorder %s23, 1
      %p151 = por %p149, %p150
      %p152 = scmp.ne.s32.totalorder %s143, %s144
      %p153 = scmp.eq.s32.totalorder %s23, 0
      %p154 = por %p152, %p153
      %p155 = scmp.ne.s32.totalorder %s143, %s144
      %p156 = scmp.eq.s32.totalorder %s24, 1
      %p157 = por %p155, %p156
      %p159 = scmp.ne.s32.totalorder %s144, %s158
      %p160 = scmp.eq.s32.totalorder %s24, 0
      %p161 = por %p159, %p160
      %s163 = sadd.s32 %s162, 1
      %p166 = scmp.eq.s32.totalorder %s18, 1
      %p167 = scmp.ne.s32.totalorder %s162, %s164
      %p168 = scmp.eq.s32.totalorder %s18, 0
      %p169 = por %p167, %p168
      %p170 = scmp.ne.s32.totalorder %s162, %s164
      %p171 = scmp.eq.s32.totalorder %s23, 1
      %p172 = por %p170, %p171
      %p173 = scmp.ne.s32.totalorder %s164, %s165
      %p174 = scmp.eq.s32.totalorder %s23, 0
      %p175 = por %p173, %p174
      %p176 = scmp.ne.s32.totalorder %s164, %s165
      %p177 = scmp.eq.s32.totalorder %s24, 1
      %p178 = por %p176, %p177
      %p180 = scmp.ne.s32.totalorder %s165, %s179
      %p181 = scmp.eq.s32.totalorder %s24, 0
      %p182 = por %p180, %p181
      %s184 = sadd.s32 %s183, 1
      %p187 = scmp.eq.s32.totalorder %s18, 1
      %p188 = scmp.ne.s32.totalorder %s183, %s185
      %p189 = scmp.eq.s32.totalorder %s18, 0
      %p190 = por %p188, %p189
      %p191 = scmp.ne.s32.totalorder %s183, %s185
      %p192 = scmp.eq.s32.totalorder %s23, 1
      %p193 = por %p191, %p192
      %p194 = scmp.ne.s32.totalorder %s185, %s186
      %p195 = scmp.eq.s32.totalorder %s23, 0
      %p196 = por %p194, %p195
      %p197 = scmp.ne.s32.totalorder %s185, %s186
      %p198 = scmp.eq.s32.totalorder %s24, 1
      %p199 = por %p197, %p198
      %p201 = scmp.ne.s32.totalorder %s186, %s200
      %p202 = scmp.eq.s32.totalorder %s24, 0
      %p203 = por %p201, %p202
      %s204 = ssub.s32 %s18, %s25
      %p205 = scmp.eq.s32.totalorder %s204, 0
      %s207 = sadd.s32 %s206, 1
      %s208 = scalar_select %p205, %s206, %s207
      %p211 = pneg %p205
      %p212 = scmp.eq.s32.totalorder %s18, 1
      %p213 = por %p211, %p212
      %p214 = scmp.ne.s32.totalorder %s206, %s209
      %p215 = scmp.eq.s32.totalorder %s18, 0
      %p216 = por %p214, %p215
      %p217 = scmp.ne.s32.totalorder %s206, %s209
      %p218 = scmp.eq.s32.totalorder %s23, 1
      %p219 = por %p217, %p218
      %p220 = scmp.ne.s32.totalorder %s209, %s210
      %p221 = scmp.eq.s32.totalorder %s23, 0
      %p222 = por %p220, %p221
      %p223 = scmp.ne.s32.totalorder %s209, %s210
      %p224 = scmp.eq.s32.totalorder %s24, 1
      %p225 = por %p223, %p224
      %p227 = scmp.ne.s32.totalorder %s210, %s226
      %p228 = scmp.eq.s32.totalorder %s24, 0
      %p229 = por %p227, %p228
      %s230 = ssub.s32 %s18, %s25
      %p231 = scmp.eq.s32.totalorder %s230, 0
      %s233 = sadd.s32 %s232, 1
      %s234 = scalar_select %p231, %s232, %s233
      %p237 = pneg %p231
      %p238 = scmp.eq.s32.totalorder %s18, 1
      %p239 = por %p237, %p238
      %p240 = scmp.ne.s32.totalorder %s232, %s235
      %p241 = scmp.eq.s32.totalorder %s18, 0
      %p242 = por %p240, %p241
      %p243 = scmp.ne.s32.totalorder %s232, %s235
      %p244 = scmp.eq.s32.totalorder %s23, 1
      %p245 = por %p243, %p244
      %p246 = scmp.ne.s32.totalorder %s235, %s236
      %p247 = scmp.eq.s32.totalorder %s23, 0
      %p248 = por %p246, %p247
      %p249 = scmp.ne.s32.totalorder %s235, %s236
      %p250 = scmp.eq.s32.totalorder %s24, 1
      %p251 = por %p249, %p250
      %p253 = scmp.ne.s32.totalorder %s236, %s252
      %p254 = scmp.eq.s32.totalorder %s24, 0
      %p255 = por %p253, %p254
      %p256 = scmp.le.s32.totalorder 1, %s18
      %p257 = scmp.lt.s32.totalorder %s18, 3
      %p258 = pnand %p256, %p257
      %p259 = pneg %p258
      // Predicated region
      $region9: #{tpu_custom_call.1} parent=5 // pred_check
        _
      $region10: #{tpu_custom_call.1} parent=5 // pred_check_branch
        %261 = sbr.rel (%p258) target = $region12
      $region11: #{tpu_custom_call.1} parent=5 // pred_region
        %s262 = ssub.s32 %s18, 1
        // Predicated region
        $region13: #{tpu_custom_call.1} parent=11 // pred_check
          %p263 = pneg %p91
        $region14: #{tpu_custom_call.1} parent=11 // pred_check_branch
          %265 = sbr.rel (%p263) target = $region16
        $region15: #{tpu_custom_call.1} parent=11 // pred_region
          %267 = vsyncadd [#allocation5], 0
          %s268 = sshll.u32 %s2, 4
          %s269 = int_to_ptr.hbm [resolvable:$true] %s268
          %s270 = sshll.u32 [#allocation4], 4
          %s271 = int_to_ptr.vmem [resolvable:$true] %s270
          %276 = dma.hbm_to_vmem [thread:$0]  %s269, 2048, %s271, [#allocation5], 256, 256, 16
        $region16: #{tpu_custom_call.1} parent=11 // pred_fallthru
          _
        // Predicated region
        $region17: #{tpu_custom_call.1} parent=11 // pred_check
          %p277 = pneg %p112
        $region18: #{tpu_custom_call.1} parent=11 // pred_check_branch
          %279 = sbr.rel (%p277) target = $region20
        $region19: #{tpu_custom_call.1} parent=11 // pred_region
          %281 = vsyncadd [#allocation7], 0
          %s282 = sshll.u32 %s3, 4
          %s283 = int_to_ptr.hbm [resolvable:$true] %s282
          %s284 = sshll.u32 [#allocation6], 4
          %s285 = int_to_ptr.vmem [resolvable:$true] %s284
          %290 = dma.hbm_to_vmem [thread:$0]  %s283, 2048, %s285, [#allocation7], 256, 256, 16
        $region20: #{tpu_custom_call.1} parent=11 // pred_fallthru
          _
        // Predicated region
        $region21: #{tpu_custom_call.1} parent=11 // pred_check
          %p291 = pneg %p133
        $region22: #{tpu_custom_call.1} parent=11 // pred_check_branch
          %293 = sbr.rel (%p291) target = $region24
        $region23: #{tpu_custom_call.1} parent=11 // pred_region
          _
        $region24: #{tpu_custom_call.1} parent=11 // pred_fallthru
          _
        // Predicated region
        $region25: #{tpu_custom_call.1} parent=11 // pred_check
          %p294 = pneg %p154
        $region26: #{tpu_custom_call.1} parent=11 // pred_check_branch
          %296 = sbr.rel (%p294) target = $region28
        $region27: #{tpu_custom_call.1} parent=11 // pred_region
          _
        $region28: #{tpu_custom_call.1} parent=11 // pred_fallthru
          _
        // Predicated region
        $region29: #{tpu_custom_call.1} parent=11 // pred_check
          %p297 = pneg %p175
        $region30: #{tpu_custom_call.1} parent=11 // pred_check_branch
          %299 = sbr.rel (%p297) target = $region32
        $region31: #{tpu_custom_call.1} parent=11 // pred_region
          _
        $region32: #{tpu_custom_call.1} parent=11 // pred_fallthru
          _
        // Predicated region
        $region33: #{tpu_custom_call.1} parent=11 // pred_check
          %p300 = pneg %p196
        $region34: #{tpu_custom_call.1} parent=11 // pred_check_branch
          %302 = sbr.rel (%p300) target = $region36
        $region35: #{tpu_custom_call.1} parent=11 // pred_region
          _
        $region36: #{tpu_custom_call.1} parent=11 // pred_fallthru
          _
      $region12: #{tpu_custom_call.1} parent=5 // pred_fallthru
        _
      %p303 = scmp.lt.s32.totalorder %s18, 2
      // Predicated region
      $region37: #{tpu_custom_call.1} parent=5 // pred_check
        %p304 = pneg %p303
      $region38: #{tpu_custom_call.1} parent=5 // pred_check_branch
        %306 = sbr.rel (%p304) target = $region40
      $region39: #{tpu_custom_call.1} parent=5 // pred_region
        // Predicated region
        $region41: #{tpu_custom_call.1} parent=39 // pred_check
          %p307 = pneg %p38
        $region42: #{tpu_custom_call.1} parent=39 // pred_check_branch
          %309 = sbr.rel (%p307) target = $region44
        $region43: #{tpu_custom_call.1} parent=39 // pred_region
          %p310 = scmp.lt.s32.totalorder %s18, 1
          %s311 = scalar_select %p310, %s18, 1
          %s312 = smul.addr %s311, 2
          %s313 = smul.addr %s312, 8
          %s314 = scalar_lea.vmem %s0, %s313
        $region44: #{tpu_custom_call.1} parent=39 // pred_fallthru
          _
        // Predicated region
        $region45: #{tpu_custom_call.1} parent=39 // pred_check
          %p315 = pneg %p64
        $region46: #{tpu_custom_call.1} parent=39 // pred_check_branch
          %317 = sbr.rel (%p315) target = $region48
        $region47: #{tpu_custom_call.1} parent=39 // pred_region
          %p318 = scmp.lt.s32.totalorder %s18, 1
          %s319 = scalar_select %p318, %s18, 1
          %s320 = scalar_lea.vmem %s1, %s319
        $region48: #{tpu_custom_call.1} parent=39 // pred_fallthru
          _
      $region40: #{tpu_custom_call.1} parent=5 // pred_fallthru
        _
      %p321 = scmp.le.s32.totalorder 1, %s18
      %p322 = scmp.lt.s32.totalorder %s18, 3
      %p323 = pnand %p321, %p322
      %p324 = pneg %p323
      // Predicated region
      $region49: #{tpu_custom_call.1} parent=5 // pred_check
        _
      $region50: #{tpu_custom_call.1} parent=5 // pred_check_branch
        %326 = sbr.rel (%p323) target = $region52
      $region51: #{tpu_custom_call.1} parent=5 // pred_region
        %s327 = ssub.s32 %s18, 1
        // Predicated region
        $region53: #{tpu_custom_call.1} parent=51 // pred_check
          %p328 = pneg %p91
        $region54: #{tpu_custom_call.1} parent=51 // pred_check_branch
          %330 = sbr.rel (%p328) target = $region56
        $region55: #{tpu_custom_call.1} parent=51 // pred_region
          %332 = dma.done [#allocation5], 2048
        $region56: #{tpu_custom_call.1} parent=51 // pred_fallthru
          _
        // Predicated region
        $region57: #{tpu_custom_call.1} parent=51 // pred_check
          %p333 = pneg %p112
        $region58: #{tpu_custom_call.1} parent=51 // pred_check_branch
          %335 = sbr.rel (%p333) target = $region60
        $region59: #{tpu_custom_call.1} parent=51 // pred_region
          %337 = dma.done [#allocation7], 2048
        $region60: #{tpu_custom_call.1} parent=51 // pred_fallthru
          _
        %p338 = scmp.lt.s32.totalorder %s23, 1
        %s339 = scalar_select %p338, %s23, 1
        %s340 = smul.addr %s339, 2
        %s341 = smul.addr %s340, 8
        %s342 = scalar_lea.vmem %s0, %s341
        %p343 = pneg %p44
        %p344 = pneg %p41
        %p345 = scmp.lt.s32.totalorder %s23, 1
        %s346 = scalar_select %p345, %s23, 1
        %s347 = scalar_lea.vmem %s1, %s346
        %p348 = pneg %p70
        %p349 = pneg %p67
        %p350 = pneg %p91
        %p351 = pneg %p88
        %p352 = pneg %p112
        %p353 = pneg %p109
        %p354 = pneg %p133
        %p355 = pneg %p130
        %p356 = pneg %p154
        %p357 = pneg %p151
        %p358 = pneg %p175
        %p359 = pneg %p172
        %p360 = pneg %p196
        %p361 = pneg %p193
        %p362 = pneg %p222
        %p363 = pneg %p219
        %p364 = scmp.lt.s32.totalorder %s23, 1
        %s365 = scalar_select %p364, %s23, 1
        %s366 = smul.addr %s365, 2
        %s367 = smul.addr %s366, 8
        %s368 = scalar_lea.vmem %s8, %s367
        %p369 = pneg %p248
        %p370 = pneg %p245
        %p371 = scmp.lt.s32.totalorder %s23, 1
        %s372 = scalar_select %p371, %s23, 1
        %s373 = smul.addr %s372, 2
        %s374 = smul.addr %s373, 8
        %s375 = scalar_lea.vmem %s9, %s374
        %p376 = scmp.lt.s32.totalorder %s23, 1
        %s377 = scalar_select %p376, %s23, 1
        %s378 = smul.addr %s377, 2
        %s379 = smul.addr %s378, 8
        %s380 = scalar_lea.vmem %s0, %s379
        %p381 = scmp.lt.s32.totalorder %s23, 1
        %s382 = scalar_select %p381, %s23, 1
        %s383 = scalar_lea.vmem %s1, %s382
        %p384 = scmp.lt.s32.totalorder %s23, 1
        %s385 = scalar_select %p384, %s23, 1
        %s386 = smul.addr %s385, 2
        %s387 = smul.addr %s386, 8
        %s388 = scalar_lea.vmem %s8, %s387
        %p389 = scmp.lt.s32.totalorder %s23, 1
        %s390 = scalar_select %p389, %s23, 1
        %s391 = smul.addr %s390, 2
        %s392 = smul.addr %s391, 8
        %s393 = scalar_lea.vmem %s9, %s392
        %v394 = vld [vmem:[%s380] sm:$0xff]
        %v395 = vld [vmem:[%s380 + $0x8] sm:$0xff]
        %v396 = vld [vmem:[#allocation4] sm:$0xff]
        %v397 = vld [vmem:[#allocation4 + $0x8] sm:$0xff]
        %v398 = vld [vmem:[#allocation4 + $0x10] sm:$0xff]
        %v399 = vld [vmem:[#allocation4 + $0x18] sm:$0xff]
        %v400 = vld [vmem:[#allocation4 + $0x20] sm:$0xff]
        %v401 = vld [vmem:[#allocation4 + $0x28] sm:$0xff]
        %v402 = vld [vmem:[#allocation4 + $0x30] sm:$0xff]
        %v403 = vld [vmem:[#allocation4 + $0x38] sm:$0xff]
        %v404 = vld [vmem:[#allocation4 + $0x40] sm:$0xff]
        %v405 = vld [vmem:[#allocation4 + $0x48] sm:$0xff]
        %v406 = vld [vmem:[#allocation4 + $0x50] sm:$0xff]
        %v407 = vld [vmem:[#allocation4 + $0x58] sm:$0xff]
        %v408 = vld [vmem:[#allocation4 + $0x60] sm:$0xff]
        %v409 = vld [vmem:[#allocation4 + $0x68] sm:$0xff]
        %v410 = vld [vmem:[#allocation4 + $0x70] sm:$0xff]
        %v411 = vld [vmem:[#allocation4 + $0x78] sm:$0xff]
        %v412 = vld [vmem:[%s4] sm:$0x3]
        %v414 = vperm.slane %v412, 0
        %v415 = vperm.slane %v412, 1
        %vm418 = vcmask 523264
        %v420 = vsel %vm418, %v394, 0
        %v423 = vsel %vm418, %v395, 0
        %425 = vmatpush.msra.mxu0 0.0
        %426 = vmatpush.msra.mxu0 0.0
        %427 = vmatpush.msra.mxu0 0.0
        %428 = vmatpush.msra.mxu0 0.0
        %429 = vmatpush.msra.mxu0 0.0
        %430 = vmatpush.msra.mxu0 0.0
        %431 = vmatpush.msra.mxu0 0.0
        %432 = vmatpush.msra.mxu0 0.0
        %v433 = vand.u32 %v410, 4294901760
        %434 = vmatpush.msra.mxu0 %v433
        %v435 = vand.u32 %v408, 4294901760
        %436 = vmatpush.msra.mxu0 %v435
        %v437 = vand.u32 %v406, 4294901760
        %438 = vmatpush.msra.mxu0 %v437
        %v439 = vand.u32 %v404, 4294901760
        %440 = vmatpush.msra.mxu0 %v439
        %v441 = vand.u32 %v402, 4294901760
        %442 = vmatpush.msra.mxu0 %v441
        %v443 = vand.u32 %v400, 4294901760
        %444 = vmatpush.msra.mxu0 %v443
        %v445 = vand.u32 %v398, 4294901760
        %446 = vmatpush.msra.mxu0 %v445
        %v447 = vand.u32 %v396, 4294901760
        %448 = vmatpush.msra.mxu0 %v447
        %v449 = vand.u32 %v420, 4294901760
        %v450 = vsub.f32 %v420, %v449
        %v451 = vand.u32 %v450, 4294901760
        %v452 = vsub.f32 %v450, %v451
        %v453 = vand.u32 %v452, 4294901760
        %454 = vmatmul.f32.gmra.mxu0 %v453
        %v455 = vpop.f32.mrf.mxu0
        %v456 = vadd.f32 %v414, %v455
        %v457 = vand.u32 %v423, 4294901760
        %v458 = vsub.f32 %v423, %v457
        %v459 = vand.u32 %v458, 4294901760
        %v460 = vsub.f32 %v458, %v459
        %v461 = vand.u32 %v460, 4294901760
        %462 = vmatmul.f32.gmra.mxu0 %v461
        %v463 = vpop.f32.mrf.mxu0
        %v464 = vadd.f32 %v414, %v463
        %465 = vdwg.mxu0
        %466 = vmatpush.msra.mxu0 0.0
        %467 = vmatpush.msra.mxu0 0.0
        %468 = vmatpush.msra.mxu0 0.0
        %469 = vmatpush.msra.mxu0 0.0
        %470 = vmatpush.msra.mxu0 0.0
        %471 = vmatpush.msra.mxu0 0.0
        %472 = vmatpush.msra.mxu0 0.0
        %473 = vmatpush.msra.mxu0 0.0
        %v474 = vand.u32 %v410, 4294901760
        %v475 = vsub.f32 %v410, %v474
        %v476 = vand.u32 %v475, 4294901760
        %v477 = vsub.f32 %v475, %v476
        %v478 = vand.u32 %v477, 4294901760
        %479 = vmatpush.msra.mxu0 %v478
        %v480 = vand.u32 %v408, 4294901760
        %v481 = vsub.f32 %v408, %v480
        %v482 = vand.u32 %v481, 4294901760
        %v483 = vsub.f32 %v481, %v482
        %v484 = vand.u32 %v483, 4294901760
        %485 = vmatpush.msra.mxu0 %v484
        %v486 = vand.u32 %v406, 4294901760
        %v487 = vsub.f32 %v406, %v486
        %v488 = vand.u32 %v487, 4294901760
        %v489 = vsub.f32 %v487, %v488
        %v490 = vand.u32 %v489, 4294901760
        %491 = vmatpush.msra.mxu0 %v490
        %v492 = vand.u32 %v404, 4294901760
        %v493 = vsub.f32 %v404, %v492
        %v494 = vand.u32 %v493, 4294901760
        %v495 = vsub.f32 %v493, %v494
        %v496 = vand.u32 %v495, 4294901760
        %497 = vmatpush.msra.mxu0 %v496
        %v498 = vand.u32 %v402, 4294901760
        %v499 = vsub.f32 %v402, %v498
        %v500 = vand.u32 %v499, 4294901760
        %v501 = vsub.f32 %v499, %v500
        %v502 = vand.u32 %v501, 4294901760
        %503 = vmatpush.msra.mxu0 %v502
        %v504 = vand.u32 %v400, 4294901760
        %v505 = vsub.f32 %v400, %v504
        %v506 = vand.u32 %v505, 4294901760
        %v507 = vsub.f32 %v505, %v506
        %v508 = vand.u32 %v507, 4294901760
        %509 = vmatpush.msra.mxu0 %v508
        %v510 = vand.u32 %v398, 4294901760
        %v511 = vsub.f32 %v398, %v510
        %v512 = vand.u32 %v511, 4294901760
        %v513 = vsub.f32 %v511, %v512
        %v514 = vand.u32 %v513, 4294901760
        %515 = vmatpush.msra.mxu0 %v514
        %v516 = vand.u32 %v396, 4294901760
        %v517 = vsub.f32 %v396, %v516
        %v518 = vand.u32 %v517, 4294901760
        %v519 = vsub.f32 %v517, %v518
        %v520 = vand.u32 %v519, 4294901760
        %521 = vmatpush.msra.mxu0 %v520
        %v522 = vand.u32 %v420, 4294901760
        %523 = vmatmul.f32.gmra.mxu0 %v522
        %v524 = vpop.f32.mrf.mxu0
        %v525 = vadd.f32 %v456, %v524
        %v526 = vand.u32 %v423, 4294901760
        %527 = vmatmul.f32.gmra.mxu0 %v526
        %v528 = vpop.f32.mrf.mxu0
        %v529 = vadd.f32 %v464, %v528
        %530 = vdwg.mxu0
        %531 = vmatpush.msra.mxu0 0.0
        %532 = vmatpush.msra.mxu0 0.0
        %533 = vmatpush.msra.mxu0 0.0
        %534 = vmatpush.msra.mxu0 0.0
        %535 = vmatpush.msra.mxu0 0.0
        %536 = vmatpush.msra.mxu0 0.0
        %537 = vmatpush.msra.mxu0 0.0
        %538 = vmatpush.msra.mxu0 0.0
        %v539 = vand.u32 %v410, 4294901760
        %v540 = vsub.f32 %v410, %v539
        %541 = vmatpush.msra.mxu0 %v540
        %v542 = vand.u32 %v408, 4294901760
        %v543 = vsub.f32 %v408, %v542
        %544 = vmatpush.msra.mxu0 %v543
        %v545 = vand.u32 %v406, 4294901760
        %v546 = vsub.f32 %v406, %v545
        %547 = vmatpush.msra.mxu0 %v546
        %v548 = vand.u32 %v404, 4294901760
        %v549 = vsub.f32 %v404, %v548
        %550 = vmatpush.msra.mxu0 %v549
        %v551 = vand.u32 %v402, 4294901760
        %v552 = vsub.f32 %v402, %v551
        %553 = vmatpush.msra.mxu0 %v552
        %v554 = vand.u32 %v400, 4294901760
        %v555 = vsub.f32 %v400, %v554
        %556 = vmatpush.msra.mxu0 %v555
        %v557 = vand.u32 %v398, 4294901760
        %v558 = vsub.f32 %v398, %v557
        %559 = vmatpush.msra.mxu0 %v558
        %v560 = vand.u32 %v396, 4294901760
        %v561 = vsub.f32 %v396, %v560
        %562 = vmatpush.msra.mxu0 %v561
        %v563 = vand.u32 %v420, 4294901760
        %v564 = vsub.f32 %v420, %v563
        %565 = vmatmul.f32.gmra.mxu0 %v564
        %v566 = vpop.f32.mrf.mxu0
        %v567 = vadd.f32 %v525, %v566
        %v568 = vand.u32 %v423, 4294901760
        %v569 = vsub.f32 %v423, %v568
        %570 = vmatmul.f32.gmra.mxu0 %v569
        %v571 = vpop.f32.mrf.mxu0
        %v572 = vadd.f32 %v529, %v571
        %573 = vdwg.mxu0
        %574 = vmatpush.msra.mxu0 0.0
        %575 = vmatpush.msra.mxu0 0.0
        %576 = vmatpush.msra.mxu0 0.0
        %577 = vmatpush.msra.mxu0 0.0
        %578 = vmatpush.msra.mxu0 0.0
        %579 = vmatpush.msra.mxu0 0.0
        %580 = vmatpush.msra.mxu0 0.0
        %581 = vmatpush.msra.mxu0 0.0
        %v582 = vand.u32 %v410, 4294901760
        %583 = vmatpush.msra.mxu0 %v582
        %v584 = vand.u32 %v408, 4294901760
        %585 = vmatpush.msra.mxu0 %v584
        %v586 = vand.u32 %v406, 4294901760
        %587 = vmatpush.msra.mxu0 %v586
        %v588 = vand.u32 %v404, 4294901760
        %589 = vmatpush.msra.mxu0 %v588
        %v590 = vand.u32 %v402, 4294901760
        %591 = vmatpush.msra.mxu0 %v590
        %v592 = vand.u32 %v400, 4294901760
        %593 = vmatpush.msra.mxu0 %v592
        %v594 = vand.u32 %v398, 4294901760
        %595 = vmatpush.msra.mxu0 %v594
        %v596 = vand.u32 %v396, 4294901760
        %597 = vmatpush.msra.mxu0 %v596
        %v598 = vand.u32 %v420, 4294901760
        %v599 = vsub.f32 %v420, %v598
        %v600 = vand.u32 %v599, 4294901760
        %601 = vmatmul.f32.gmra.mxu0 %v600
        %v602 = vpop.f32.mrf.mxu0
        %v603 = vadd.f32 %v567, %v602
        %v604 = vand.u32 %v423, 4294901760
        %v605 = vsub.f32 %v423, %v604
        %v606 = vand.u32 %v605, 4294901760
        %607 = vmatmul.f32.gmra.mxu0 %v606
        %v608 = vpop.f32.mrf.mxu0
        %v609 = vadd.f32 %v572, %v608
        %610 = vdwg.mxu0
        %611 = vmatpush.msra.mxu0 0.0
        %612 = vmatpush.msra.mxu0 0.0
        %613 = vmatpush.msra.mxu0 0.0
        %614 = vmatpush.msra.mxu0 0.0
        %615 = vmatpush.msra.mxu0 0.0
        %616 = vmatpush.msra.mxu0 0.0
        %617 = vmatpush.msra.mxu0 0.0
        %618 = vmatpush.msra.mxu0 0.0
        %v619 = vand.u32 %v410, 4294901760
        %v620 = vsub.f32 %v410, %v619
        %v621 = vand.u32 %v620, 4294901760
        %622 = vmatpush.msra.mxu0 %v621
        %v623 = vand.u32 %v408, 4294901760
        %v624 = vsub.f32 %v408, %v623
        %v625 = vand.u32 %v624, 4294901760
        %626 = vmatpush.msra.mxu0 %v625
        %v627 = vand.u32 %v406, 4294901760
        %v628 = vsub.f32 %v406, %v627
        %v629 = vand.u32 %v628, 4294901760
        %630 = vmatpush.msra.mxu0 %v629
        %v631 = vand.u32 %v404, 4294901760
        %v632 = vsub.f32 %v404, %v631
        %v633 = vand.u32 %v632, 4294901760
        %634 = vmatpush.msra.mxu0 %v633
        %v635 = vand.u32 %v402, 4294901760
        %v636 = vsub.f32 %v402, %v635
        %v637 = vand.u32 %v636, 4294901760
        %638 = vmatpush.msra.mxu0 %v637
        %v639 = vand.u32 %v400, 4294901760
        %v640 = vsub.f32 %v400, %v639
        %v641 = vand.u32 %v640, 4294901760
        %642 = vmatpush.msra.mxu0 %v641
        %v643 = vand.u32 %v398, 4294901760
        %v644 = vsub.f32 %v398, %v643
        %v645 = vand.u32 %v644, 4294901760
        %646 = vmatpush.msra.mxu0 %v645
        %v647 = vand.u32 %v396, 4294901760
        %v648 = vsub.f32 %v396, %v647
        %v649 = vand.u32 %v648, 4294901760
        %650 = vmatpush.msra.mxu0 %v649
        %v651 = vand.u32 %v420, 4294901760
        %652 = vmatmul.f32.gmra.mxu0 %v651
        %v653 = vpop.f32.mrf.mxu0
        %v654 = vadd.f32 %v603, %v653
        %v655 = vand.u32 %v423, 4294901760
        %656 = vmatmul.f32.gmra.mxu0 %v655
        %v657 = vpop.f32.mrf.mxu0
        %v658 = vadd.f32 %v609, %v657
        %659 = vdwg.mxu0
        %660 = vmatpush.msra.mxu0 0.0
        %661 = vmatpush.msra.mxu0 0.0
        %662 = vmatpush.msra.mxu0 0.0
        %663 = vmatpush.msra.mxu0 0.0
        %664 = vmatpush.msra.mxu0 0.0
        %665 = vmatpush.msra.mxu0 0.0
        %666 = vmatpush.msra.mxu0 0.0
        %667 = vmatpush.msra.mxu0 0.0
        %v668 = vand.u32 %v410, 4294901760
        %669 = vmatpush.msra.mxu0 %v668
        %v670 = vand.u32 %v408, 4294901760
        %671 = vmatpush.msra.mxu0 %v670
        %v672 = vand.u32 %v406, 4294901760
        %673 = vmatpush.msra.mxu0 %v672
        %v674 = vand.u32 %v404, 4294901760
        %675 = vmatpush.msra.mxu0 %v674
        %v676 = vand.u32 %v402, 4294901760
        %677 = vmatpush.msra.mxu0 %v676
        %v678 = vand.u32 %v400, 4294901760
        %679 = vmatpush.msra.mxu0 %v678
        %v680 = vand.u32 %v398, 4294901760
        %681 = vmatpush.msra.mxu0 %v680
        %v682 = vand.u32 %v396, 4294901760
        %683 = vmatpush.msra.mxu0 %v682
        %v684 = vand.u32 %v420, 4294901760
        %685 = vmatmul.f32.gmra.mxu0 %v684
        %v686 = vpop.f32.mrf.mxu0
        %v687 = vadd.f32 %v654, %v686
        %v688 = vand.u32 %v423, 4294901760
        %689 = vmatmul.f32.gmra.mxu0 %v688
        %v690 = vpop.f32.mrf.mxu0
        %v691 = vadd.f32 %v658, %v690
        %692 = vdwg.mxu0
        %693 = vmatpush.msra.mxu0 0.0
        %694 = vmatpush.msra.mxu0 0.0
        %695 = vmatpush.msra.mxu0 0.0
        %696 = vmatpush.msra.mxu0 0.0
        %697 = vmatpush.msra.mxu0 0.0
        %698 = vmatpush.msra.mxu0 0.0
        %699 = vmatpush.msra.mxu0 0.0
        %700 = vmatpush.msra.mxu0 0.0
        %v701 = vand.u32 %v411, 4294901760
        %702 = vmatpush.msra.mxu0 %v701
        %v703 = vand.u32 %v409, 4294901760
        %704 = vmatpush.msra.mxu0 %v703
        %v705 = vand.u32 %v407, 4294901760
        %706 = vmatpush.msra.mxu0 %v705
        %v707 = vand.u32 %v405, 4294901760
        %708 = vmatpush.msra.mxu0 %v707
        %v709 = vand.u32 %v403, 4294901760
        %710 = vmatpush.msra.mxu0 %v709
        %v711 = vand.u32 %v401, 4294901760
        %712 = vmatpush.msra.mxu0 %v711
        %v713 = vand.u32 %v399, 4294901760
        %714 = vmatpush.msra.mxu0 %v713
        %v715 = vand.u32 %v397, 4294901760
        %716 = vmatpush.msra.mxu0 %v715
        %v717 = vand.u32 %v420, 4294901760
        %v718 = vsub.f32 %v420, %v717
        %v719 = vand.u32 %v718, 4294901760
        %v720 = vsub.f32 %v718, %v719
        %v721 = vand.u32 %v720, 4294901760
        %722 = vmatmul.f32.gmra.mxu0 %v721
        %v723 = vpop.f32.mrf.mxu0
        %v724 = vadd.f32 %v415, %v723
        %v725 = vand.u32 %v423, 4294901760
        %v726 = vsub.f32 %v423, %v725
        %v727 = vand.u32 %v726, 4294901760
        %v728 = vsub.f32 %v726, %v727
        %v729 = vand.u32 %v728, 4294901760
        %730 = vmatmul.f32.gmra.mxu0 %v729
        %v731 = vpop.f32.mrf.mxu0
        %v732 = vadd.f32 %v415, %v731
        %733 = vdwg.mxu0
        %734 = vmatpush.msra.mxu0 0.0
        %735 = vmatpush.msra.mxu0 0.0
        %736 = vmatpush.msra.mxu0 0.0
        %737 = vmatpush.msra.mxu0 0.0
        %738 = vmatpush.msra.mxu0 0.0
        %739 = vmatpush.msra.mxu0 0.0
        %740 = vmatpush.msra.mxu0 0.0
        %741 = vmatpush.msra.mxu0 0.0
        %v742 = vand.u32 %v411, 4294901760
        %v743 = vsub.f32 %v411, %v742
        %v744 = vand.u32 %v743, 4294901760
        %v745 = vsub.f32 %v743, %v744
        %v746 = vand.u32 %v745, 4294901760
        %747 = vmatpush.msra.mxu0 %v746
        %v748 = vand.u32 %v409, 4294901760
        %v749 = vsub.f32 %v409, %v748
        %v750 = vand.u32 %v749, 4294901760
        %v751 = vsub.f32 %v749, %v750
        %v752 = vand.u32 %v751, 4294901760
        %753 = vmatpush.msra.mxu0 %v752
        %v754 = vand.u32 %v407, 4294901760
        %v755 = vsub.f32 %v407, %v754
        %v756 = vand.u32 %v755, 4294901760
        %v757 = vsub.f32 %v755, %v756
        %v758 = vand.u32 %v757, 4294901760
        %759 = vmatpush.msra.mxu0 %v758
        %v760 = vand.u32 %v405, 4294901760
        %v761 = vsub.f32 %v405, %v760
        %v762 = vand.u32 %v761, 4294901760
        %v763 = vsub.f32 %v761, %v762
        %v764 = vand.u32 %v763, 4294901760
        %765 = vmatpush.msra.mxu0 %v764
        %v766 = vand.u32 %v403, 4294901760
        %v767 = vsub.f32 %v403, %v766
        %v768 = vand.u32 %v767, 4294901760
        %v769 = vsub.f32 %v767, %v768
        %v770 = vand.u32 %v769, 4294901760
        %771 = vmatpush.msra.mxu0 %v770
        %v772 = vand.u32 %v401, 4294901760
        %v773 = vsub.f32 %v401, %v772
        %v774 = vand.u32 %v773, 4294901760
        %v775 = vsub.f32 %v773, %v774
        %v776 = vand.u32 %v775, 4294901760
        %777 = vmatpush.msra.mxu0 %v776
        %v778 = vand.u32 %v399, 4294901760
        %v779 = vsub.f32 %v399, %v778
        %v780 = vand.u32 %v779, 4294901760
        %v781 = vsub.f32 %v779, %v780
        %v782 = vand.u32 %v781, 4294901760
        %783 = vmatpush.msra.mxu0 %v782
        %v784 = vand.u32 %v397, 4294901760
        %v785 = vsub.f32 %v397, %v784
        %v786 = vand.u32 %v785, 4294901760
        %v787 = vsub.f32 %v785, %v786
        %v788 = vand.u32 %v787, 4294901760
        %789 = vmatpush.msra.mxu0 %v788
        %v790 = vand.u32 %v420, 4294901760
        %791 = vmatmul.f32.gmra.mxu0 %v790
        %v792 = vpop.f32.mrf.mxu0
        %v793 = vadd.f32 %v724, %v792
        %v794 = vand.u32 %v423, 4294901760
        %795 = vmatmul.f32.gmra.mxu0 %v794
        %v796 = vpop.f32.mrf.mxu0
        %v797 = vadd.f32 %v732, %v796
        %798 = vdwg.mxu0
        %799 = vmatpush.msra.mxu0 0.0
        %800 = vmatpush.msra.mxu0 0.0
        %801 = vmatpush.msra.mxu0 0.0
        %802 = vmatpush.msra.mxu0 0.0
        %803 = vmatpush.msra.mxu0 0.0
        %804 = vmatpush.msra.mxu0 0.0
        %805 = vmatpush.msra.mxu0 0.0
        %806 = vmatpush.msra.mxu0 0.0
        %v807 = vand.u32 %v411, 4294901760
        %v808 = vsub.f32 %v411, %v807
        %809 = vmatpush.msra.mxu0 %v808
        %v810 = vand.u32 %v409, 4294901760
        %v811 = vsub.f32 %v409, %v810
        %812 = vmatpush.msra.mxu0 %v811
        %v813 = vand.u32 %v407, 4294901760
        %v814 = vsub.f32 %v407, %v813
        %815 = vmatpush.msra.mxu0 %v814
        %v816 = vand.u32 %v405, 4294901760
        %v817 = vsub.f32 %v405, %v816
        %818 = vmatpush.msra.mxu0 %v817
        %v819 = vand.u32 %v403, 4294901760
        %v820 = vsub.f32 %v403, %v819
        %821 = vmatpush.msra.mxu0 %v820
        %v822 = vand.u32 %v401, 4294901760
        %v823 = vsub.f32 %v401, %v822
        %824 = vmatpush.msra.mxu0 %v823
        %v825 = vand.u32 %v399, 4294901760
        %v826 = vsub.f32 %v399, %v825
        %827 = vmatpush.msra.mxu0 %v826
        %v828 = vand.u32 %v397, 4294901760
        %v829 = vsub.f32 %v397, %v828
        %830 = vmatpush.msra.mxu0 %v829
        %v831 = vand.u32 %v420, 4294901760
        %v832 = vsub.f32 %v420, %v831
        %833 = vmatmul.f32.gmra.mxu0 %v832
        %v834 = vpop.f32.mrf.mxu0
        %v835 = vadd.f32 %v793, %v834
        %v836 = vand.u32 %v423, 4294901760
        %v837 = vsub.f32 %v423, %v836
        %838 = vmatmul.f32.gmra.mxu0 %v837
        %v839 = vpop.f32.mrf.mxu0
        %v840 = vadd.f32 %v797, %v839
        %841 = vdwg.mxu0
        %842 = vmatpush.msra.mxu0 0.0
        %843 = vmatpush.msra.mxu0 0.0
        %844 = vmatpush.msra.mxu0 0.0
        %845 = vmatpush.msra.mxu0 0.0
        %846 = vmatpush.msra.mxu0 0.0
        %847 = vmatpush.msra.mxu0 0.0
        %848 = vmatpush.msra.mxu0 0.0
        %849 = vmatpush.msra.mxu0 0.0
        %v850 = vand.u32 %v411, 4294901760
        %851 = vmatpush.msra.mxu0 %v850
        %v852 = vand.u32 %v409, 4294901760
        %853 = vmatpush.msra.mxu0 %v852
        %v854 = vand.u32 %v407, 4294901760
        %855 = vmatpush.msra.mxu0 %v854
        %v856 = vand.u32 %v405, 4294901760
        %857 = vmatpush.msra.mxu0 %v856
        %v858 = vand.u32 %v403, 4294901760
        %859 = vmatpush.msra.mxu0 %v858
        %v860 = vand.u32 %v401, 4294901760
        %861 = vmatpush.msra.mxu0 %v860
        %v862 = vand.u32 %v399, 4294901760
        %863 = vmatpush.msra.mxu0 %v862
        %v864 = vand.u32 %v397, 4294901760
        %865 = vmatpush.msra.mxu0 %v864
        %v866 = vand.u32 %v420, 4294901760
        %v867 = vsub.f32 %v420, %v866
        %v868 = vand.u32 %v867, 4294901760
        %869 = vmatmul.f32.gmra.mxu0 %v868
        %v870 = vpop.f32.mrf.mxu0
        %v871 = vadd.f32 %v835, %v870
        %v872 = vand.u32 %v423, 4294901760
        %v873 = vsub.f32 %v423, %v872
        %v874 = vand.u32 %v873, 4294901760
        %875 = vmatmul.f32.gmra.mxu0 %v874
        %v876 = vpop.f32.mrf.mxu0
        %v877 = vadd.f32 %v840, %v876
        %878 = vdwg.mxu0
        %879 = vmatpush.msra.mxu0 0.0
        %880 = vmatpush.msra.mxu0 0.0
        %881 = vmatpush.msra.mxu0 0.0
        %882 = vmatpush.msra.mxu0 0.0
        %883 = vmatpush.msra.mxu0 0.0
        %884 = vmatpush.msra.mxu0 0.0
        %885 = vmatpush.msra.mxu0 0.0
        %886 = vmatpush.msra.mxu0 0.0
        %v887 = vand.u32 %v411, 4294901760
        %v888 = vsub.f32 %v411, %v887
        %v889 = vand.u32 %v888, 4294901760
        %890 = vmatpush.msra.mxu0 %v889
        %v891 = vand.u32 %v409, 4294901760
        %v892 = vsub.f32 %v409, %v891
        %v893 = vand.u32 %v892, 4294901760
        %894 = vmatpush.msra.mxu0 %v893
        %v895 = vand.u32 %v407, 4294901760
        %v896 = vsub.f32 %v407, %v895
        %v897 = vand.u32 %v896, 4294901760
        %898 = vmatpush.msra.mxu0 %v897
        %v899 = vand.u32 %v405, 4294901760
        %v900 = vsub.f32 %v405, %v899
        %v901 = vand.u32 %v900, 4294901760
        %902 = vmatpush.msra.mxu0 %v901
        %v903 = vand.u32 %v403, 4294901760
        %v904 = vsub.f32 %v403, %v903
        %v905 = vand.u32 %v904, 4294901760
        %906 = vmatpush.msra.mxu0 %v905
        %v907 = vand.u32 %v401, 4294901760
        %v908 = vsub.f32 %v401, %v907
        %v909 = vand.u32 %v908, 4294901760
        %910 = vmatpush.msra.mxu0 %v909
        %v911 = vand.u32 %v399, 4294901760
        %v912 = vsub.f32 %v399, %v911
        %v913 = vand.u32 %v912, 4294901760
        %914 = vmatpush.msra.mxu0 %v913
        %v915 = vand.u32 %v397, 4294901760
        %v916 = vsub.f32 %v397, %v915
        %v917 = vand.u32 %v916, 4294901760
        %918 = vmatpush.msra.mxu0 %v917
        %v919 = vand.u32 %v420, 4294901760
        %920 = vmatmul.f32.gmra.mxu0 %v919
        %v921 = vpop.f32.mrf.mxu0
        %v922 = vadd.f32 %v871, %v921
        %v923 = vand.u32 %v423, 4294901760
        %924 = vmatmul.f32.gmra.mxu0 %v923
        %v925 = vpop.f32.mrf.mxu0
        %v926 = vadd.f32 %v877, %v925
        %927 = vdwg.mxu0
        %928 = vmatpush.msra.mxu0 0.0
        %929 = vmatpush.msra.mxu0 0.0
        %930 = vmatpush.msra.mxu0 0.0
        %931 = vmatpush.msra.mxu0 0.0
        %932 = vmatpush.msra.mxu0 0.0
        %933 = vmatpush.msra.mxu0 0.0
        %934 = vmatpush.msra.mxu0 0.0
        %935 = vmatpush.msra.mxu0 0.0
        %v936 = vand.u32 %v411, 4294901760
        %937 = vmatpush.msra.mxu0 %v936
        %v938 = vand.u32 %v409, 4294901760
        %939 = vmatpush.msra.mxu0 %v938
        %v940 = vand.u32 %v407, 4294901760
        %941 = vmatpush.msra.mxu0 %v940
        %v942 = vand.u32 %v405, 4294901760
        %943 = vmatpush.msra.mxu0 %v942
        %v944 = vand.u32 %v403, 4294901760
        %945 = vmatpush.msra.mxu0 %v944
        %v946 = vand.u32 %v401, 4294901760
        %947 = vmatpush.msra.mxu0 %v946
        %v948 = vand.u32 %v399, 4294901760
        %949 = vmatpush.msra.mxu0 %v948
        %v950 = vand.u32 %v397, 4294901760
        %951 = vmatpush.msra.mxu0 %v950
        %v952 = vand.u32 %v420, 4294901760
        %953 = vmatmul.f32.gmra.mxu0 %v952
        %v954 = vpop.f32.mrf.mxu0
        %v955 = vadd.f32 %v922, %v954
        %v956 = vand.u32 %v423, 4294901760
        %957 = vmatmul.f32.gmra.mxu0 %v956
        %v958 = vpop.f32.mrf.mxu0
        %v959 = vadd.f32 %v926, %v958
        %960 = vdwg.mxu0
        %961 = vst [vmem:[#allocation2] sm:$0xff] %v687
        %962 = vst [vmem:[#allocation2 + $0x8] sm:$0xff] %v955
        %963 = vst [vmem:[#allocation2 + $0x10] sm:$0xff] %v691
        %964 = vst [vmem:[#allocation2 + $0x18] sm:$0xff] %v959
        %v965 = vld [vmem:[%s383] sm:$0x1]
        loop: start=0, step=1, limit=16
        $region61: #{tpu_custom_call.1} parent=51 // loop_pre_header
          _
        $region62: #{tpu_custom_call.1} parent=51 // loop_header
          %s967 = sphi 0, %s971
          %p968 = scmp.ge.s32.totalorder %s967, 16
          %v972 = vphi 0.0, %v1551
          %v973 = vphi 0.0, %v1552
          %v974 = vphi 0.0, %v1599
          %v975 = vphi 0.0, %v1600
        $region63: #{tpu_custom_call.1} parent=51 // loop_header_branch
          %970 = sbr.rel (%p968) target = $region67
        $region64: #{tpu_custom_call.1} parent=51 // loop_body
          %s976 = ssub.s32 15, %s967
          %v978 = vperm.slane %v972, 0
          %979 = vrot.lane.b32.xlu0 %v978, 32
          %v980 = vpop.permute.xlu0 %979
          %v983 = vperm.slane %v974, 0
          %984 = vrot.lane.b32.xlu0 %v983, 64
          %v985 = vpop.permute.xlu0 %984
          %vm987 = vcmask 261120
          %v988 = vsel %vm987, %v980, %v985
          %v989 = vld [vmem:[#allocation6] sm:$0xff]
          %v990 = vld [vmem:[#allocation6 + $0x8] sm:$0xff]
          %v991 = vld [vmem:[#allocation6 + $0x10] sm:$0xff]
          %v992 = vld [vmem:[#allocation6 + $0x18] sm:$0xff]
          %v993 = vld [vmem:[#allocation6 + $0x20] sm:$0xff]
          %v994 = vld [vmem:[#allocation6 + $0x28] sm:$0xff]
          %v995 = vld [vmem:[#allocation6 + $0x30] sm:$0xff]
          %v996 = vld [vmem:[#allocation6 + $0x38] sm:$0xff]
          %v997 = vld [vmem:[#allocation6 + $0x40] sm:$0xff]
          %v998 = vld [vmem:[#allocation6 + $0x48] sm:$0xff]
          %v999 = vld [vmem:[#allocation6 + $0x50] sm:$0xff]
          %v1000 = vld [vmem:[#allocation6 + $0x58] sm:$0xff]
          %v1001 = vld [vmem:[#allocation6 + $0x60] sm:$0xff]
          %v1002 = vld [vmem:[#allocation6 + $0x68] sm:$0xff]
          %v1003 = vld [vmem:[#allocation6 + $0x70] sm:$0xff]
          %v1004 = vld [vmem:[#allocation6 + $0x78] sm:$0xff]
          %v1006 = vsel %vm418, %v988, 0
          %1008 = vmatpush.msra.mxu0 0.0
          %1009 = vmatpush.msra.mxu0 0.0
          %1010 = vmatpush.msra.mxu0 0.0
          %1011 = vmatpush.msra.mxu0 0.0
          %1012 = vmatpush.msra.mxu0 0.0
          %1013 = vmatpush.msra.mxu0 0.0
          %1014 = vmatpush.msra.mxu0 0.0
          %1015 = vmatpush.msra.mxu0 0.0
          %v1016 = vand.u32 %v1003, 4294901760
          %1017 = vmatpush.msra.mxu0 %v1016
          %v1018 = vand.u32 %v1001, 4294901760
          %1019 = vmatpush.msra.mxu0 %v1018
          %v1020 = vand.u32 %v999, 4294901760
          %1021 = vmatpush.msra.mxu0 %v1020
          %v1022 = vand.u32 %v997, 4294901760
          %1023 = vmatpush.msra.mxu0 %v1022
          %v1024 = vand.u32 %v995, 4294901760
          %1025 = vmatpush.msra.mxu0 %v1024
          %v1026 = vand.u32 %v993, 4294901760
          %1027 = vmatpush.msra.mxu0 %v1026
          %v1028 = vand.u32 %v991, 4294901760
          %1029 = vmatpush.msra.mxu0 %v1028
          %v1030 = vand.u32 %v989, 4294901760
          %1031 = vmatpush.msra.mxu0 %v1030
          %v1032 = vand.u32 %v1006, 4294901760
          %v1033 = vsub.f32 %v1006, %v1032
          %v1034 = vand.u32 %v1033, 4294901760
          %v1035 = vsub.f32 %v1033, %v1034
          %v1036 = vand.u32 %v1035, 4294901760
          %1037 = vmatmul.f32.gmra.mxu0 %v1036
          %v1038 = vpop.f32.mrf.mxu0
          %v1039 = vadd.f32 0.0, %v1038
          %1040 = vdwg.mxu0
          %1041 = vmatpush.msra.mxu0 0.0
          %1042 = vmatpush.msra.mxu0 0.0
          %1043 = vmatpush.msra.mxu0 0.0
          %1044 = vmatpush.msra.mxu0 0.0
          %1045 = vmatpush.msra.mxu0 0.0
          %1046 = vmatpush.msra.mxu0 0.0
          %1047 = vmatpush.msra.mxu0 0.0
          %1048 = vmatpush.msra.mxu0 0.0
          %v1049 = vand.u32 %v1003, 4294901760
          %v1050 = vsub.f32 %v1003, %v1049
          %v1051 = vand.u32 %v1050, 4294901760
          %v1052 = vsub.f32 %v1050, %v1051
          %v1053 = vand.u32 %v1052, 4294901760
          %1054 = vmatpush.msra.mxu0 %v1053
          %v1055 = vand.u32 %v1001, 4294901760
          %v1056 = vsub.f32 %v1001, %v1055
          %v1057 = vand.u32 %v1056, 4294901760
          %v1058 = vsub.f32 %v1056, %v1057
          %v1059 = vand.u32 %v1058, 4294901760
          %1060 = vmatpush.msra.mxu0 %v1059
          %v1061 = vand.u32 %v999, 4294901760
          %v1062 = vsub.f32 %v999, %v1061
          %v1063 = vand.u32 %v1062, 4294901760
          %v1064 = vsub.f32 %v1062, %v1063
          %v1065 = vand.u32 %v1064, 4294901760
          %1066 = vmatpush.msra.mxu0 %v1065
          %v1067 = vand.u32 %v997, 4294901760
          %v1068 = vsub.f32 %v997, %v1067
          %v1069 = vand.u32 %v1068, 4294901760
          %v1070 = vsub.f32 %v1068, %v1069
          %v1071 = vand.u32 %v1070, 4294901760
          %1072 = vmatpush.msra.mxu0 %v1071
          %v1073 = vand.u32 %v995, 4294901760
          %v1074 = vsub.f32 %v995, %v1073
          %v1075 = vand.u32 %v1074, 4294901760
          %v1076 = vsub.f32 %v1074, %v1075
          %v1077 = vand.u32 %v1076, 4294901760
          %1078 = vmatpush.msra.mxu0 %v1077
          %v1079 = vand.u32 %v993, 4294901760
          %v1080 = vsub.f32 %v993, %v1079
          %v1081 = vand.u32 %v1080, 4294901760
          %v1082 = vsub.f32 %v1080, %v1081
          %v1083 = vand.u32 %v1082, 4294901760
          %1084 = vmatpush.msra.mxu0 %v1083
          %v1085 = vand.u32 %v991, 4294901760
          %v1086 = vsub.f32 %v991, %v1085
          %v1087 = vand.u32 %v1086, 4294901760
          %v1088 = vsub.f32 %v1086, %v1087
          %v1089 = vand.u32 %v1088, 4294901760
          %1090 = vmatpush.msra.mxu0 %v1089
          %v1091 = vand.u32 %v989, 4294901760
          %v1092 = vsub.f32 %v989, %v1091
          %v1093 = vand.u32 %v1092, 4294901760
          %v1094 = vsub.f32 %v1092, %v1093
          %v1095 = vand.u32 %v1094, 4294901760
          %1096 = vmatpush.msra.mxu0 %v1095
          %v1097 = vand.u32 %v1006, 4294901760
          %1098 = vmatmul.f32.gmra.mxu0 %v1097
          %v1099 = vpop.f32.mrf.mxu0
          %v1100 = vadd.f32 %v1039, %v1099
          %1101 = vdwg.mxu0
          %1102 = vmatpush.msra.mxu0 0.0
          %1103 = vmatpush.msra.mxu0 0.0
          %1104 = vmatpush.msra.mxu0 0.0
          %1105 = vmatpush.msra.mxu0 0.0
          %1106 = vmatpush.msra.mxu0 0.0
          %1107 = vmatpush.msra.mxu0 0.0
          %1108 = vmatpush.msra.mxu0 0.0
          %1109 = vmatpush.msra.mxu0 0.0
          %v1110 = vand.u32 %v1003, 4294901760
          %v1111 = vsub.f32 %v1003, %v1110
          %1112 = vmatpush.msra.mxu0 %v1111
          %v1113 = vand.u32 %v1001, 4294901760
          %v1114 = vsub.f32 %v1001, %v1113
          %1115 = vmatpush.msra.mxu0 %v1114
          %v1116 = vand.u32 %v999, 4294901760
          %v1117 = vsub.f32 %v999, %v1116
          %1118 = vmatpush.msra.mxu0 %v1117
          %v1119 = vand.u32 %v997, 4294901760
          %v1120 = vsub.f32 %v997, %v1119
          %1121 = vmatpush.msra.mxu0 %v1120
          %v1122 = vand.u32 %v995, 4294901760
          %v1123 = vsub.f32 %v995, %v1122
          %1124 = vmatpush.msra.mxu0 %v1123
          %v1125 = vand.u32 %v993, 4294901760
          %v1126 = vsub.f32 %v993, %v1125
          %1127 = vmatpush.msra.mxu0 %v1126
          %v1128 = vand.u32 %v991, 4294901760
          %v1129 = vsub.f32 %v991, %v1128
          %1130 = vmatpush.msra.mxu0 %v1129
          %v1131 = vand.u32 %v989, 4294901760
          %v1132 = vsub.f32 %v989, %v1131
          %1133 = vmatpush.msra.mxu0 %v1132
          %v1134 = vand.u32 %v1006, 4294901760
          %v1135 = vsub.f32 %v1006, %v1134
          %1136 = vmatmul.f32.gmra.mxu0 %v1135
          %v1137 = vpop.f32.mrf.mxu0
          %v1138 = vadd.f32 %v1100, %v1137
          %1139 = vdwg.mxu0
          %1140 = vmatpush.msra.mxu0 0.0
          %1141 = vmatpush.msra.mxu0 0.0
          %1142 = vmatpush.msra.mxu0 0.0
          %1143 = vmatpush.msra.mxu0 0.0
          %1144 = vmatpush.msra.mxu0 0.0
          %1145 = vmatpush.msra.mxu0 0.0
          %1146 = vmatpush.msra.mxu0 0.0
          %1147 = vmatpush.msra.mxu0 0.0
          %v1148 = vand.u32 %v1003, 4294901760
          %1149 = vmatpush.msra.mxu0 %v1148
          %v1150 = vand.u32 %v1001, 4294901760
          %1151 = vmatpush.msra.mxu0 %v1150
          %v1152 = vand.u32 %v999, 4294901760
          %1153 = vmatpush.msra.mxu0 %v1152
          %v1154 = vand.u32 %v997, 4294901760
          %1155 = vmatpush.msra.mxu0 %v1154
          %v1156 = vand.u32 %v995, 4294901760
          %1157 = vmatpush.msra.mxu0 %v1156
          %v1158 = vand.u32 %v993, 4294901760
          %1159 = vmatpush.msra.mxu0 %v1158
          %v1160 = vand.u32 %v991, 4294901760
          %1161 = vmatpush.msra.mxu0 %v1160
          %v1162 = vand.u32 %v989, 4294901760
          %1163 = vmatpush.msra.mxu0 %v1162
          %v1164 = vand.u32 %v1006, 4294901760
          %v1165 = vsub.f32 %v1006, %v1164
          %v1166 = vand.u32 %v1165, 4294901760
          %1167 = vmatmul.f32.gmra.mxu0 %v1166
          %v1168 = vpop.f32.mrf.mxu0
          %v1169 = vadd.f32 %v1138, %v1168
          %1170 = vdwg.mxu0
          %1171 = vmatpush.msra.mxu0 0.0
          %1172 = vmatpush.msra.mxu0 0.0
          %1173 = vmatpush.msra.mxu0 0.0
          %1174 = vmatpush.msra.mxu0 0.0
          %1175 = vmatpush.msra.mxu0 0.0
          %1176 = vmatpush.msra.mxu0 0.0
          %1177 = vmatpush.msra.mxu0 0.0
          %1178 = vmatpush.msra.mxu0 0.0
          %v1179 = vand.u32 %v1003, 4294901760
          %v1180 = vsub.f32 %v1003, %v1179
          %v1181 = vand.u32 %v1180, 4294901760
          %1182 = vmatpush.msra.mxu0 %v1181
          %v1183 = vand.u32 %v1001, 4294901760
          %v1184 = vsub.f32 %v1001, %v1183
          %v1185 = vand.u32 %v1184, 4294901760
          %1186 = vmatpush.msra.mxu0 %v1185
          %v1187 = vand.u32 %v999, 4294901760
          %v1188 = vsub.f32 %v999, %v1187
          %v1189 = vand.u32 %v1188, 4294901760
          %1190 = vmatpush.msra.mxu0 %v1189
          %v1191 = vand.u32 %v997, 4294901760
          %v1192 = vsub.f32 %v997, %v1191
          %v1193 = vand.u32 %v1192, 4294901760
          %1194 = vmatpush.msra.mxu0 %v1193
          %v1195 = vand.u32 %v995, 4294901760
          %v1196 = vsub.f32 %v995, %v1195
          %v1197 = vand.u32 %v1196, 4294901760
          %1198 = vmatpush.msra.mxu0 %v1197
          %v1199 = vand.u32 %v993, 4294901760
          %v1200 = vsub.f32 %v993, %v1199
          %v1201 = vand.u32 %v1200, 4294901760
          %1202 = vmatpush.msra.mxu0 %v1201
          %v1203 = vand.u32 %v991, 4294901760
          %v1204 = vsub.f32 %v991, %v1203
          %v1205 = vand.u32 %v1204, 4294901760
          %1206 = vmatpush.msra.mxu0 %v1205
          %v1207 = vand.u32 %v989, 4294901760
          %v1208 = vsub.f32 %v989, %v1207
          %v1209 = vand.u32 %v1208, 4294901760
          %1210 = vmatpush.msra.mxu0 %v1209
          %v1211 = vand.u32 %v1006, 4294901760
          %1212 = vmatmul.f32.gmra.mxu0 %v1211
          %v1213 = vpop.f32.mrf.mxu0
          %v1214 = vadd.f32 %v1169, %v1213
          %1215 = vdwg.mxu0
          %1216 = vmatpush.msra.mxu0 0.0
          %1217 = vmatpush.msra.mxu0 0.0
          %1218 = vmatpush.msra.mxu0 0.0
          %1219 = vmatpush.msra.mxu0 0.0
          %1220 = vmatpush.msra.mxu0 0.0
          %1221 = vmatpush.msra.mxu0 0.0
          %1222 = vmatpush.msra.mxu0 0.0
          %1223 = vmatpush.msra.mxu0 0.0
          %v1224 = vand.u32 %v1003, 4294901760
          %1225 = vmatpush.msra.mxu0 %v1224
          %v1226 = vand.u32 %v1001, 4294901760
          %1227 = vmatpush.msra.mxu0 %v1226
          %v1228 = vand.u32 %v999, 4294901760
          %1229 = vmatpush.msra.mxu0 %v1228
          %v1230 = vand.u32 %v997, 4294901760
          %1231 = vmatpush.msra.mxu0 %v1230
          %v1232 = vand.u32 %v995, 4294901760
          %1233 = vmatpush.msra.mxu0 %v1232
          %v1234 = vand.u32 %v993, 4294901760
          %1235 = vmatpush.msra.mxu0 %v1234
          %v1236 = vand.u32 %v991, 4294901760
          %1237 = vmatpush.msra.mxu0 %v1236
          %v1238 = vand.u32 %v989, 4294901760
          %1239 = vmatpush.msra.mxu0 %v1238
          %v1240 = vand.u32 %v1006, 4294901760
          %1241 = vmatmul.f32.gmra.mxu0 %v1240
          %v1242 = vpop.f32.mrf.mxu0
          %v1243 = vadd.f32 %v1214, %v1242
          %1244 = vdwg.mxu0
          %1245 = vmatpush.msra.mxu0 0.0
          %1246 = vmatpush.msra.mxu0 0.0
          %1247 = vmatpush.msra.mxu0 0.0
          %1248 = vmatpush.msra.mxu0 0.0
          %1249 = vmatpush.msra.mxu0 0.0
          %1250 = vmatpush.msra.mxu0 0.0
          %1251 = vmatpush.msra.mxu0 0.0
          %1252 = vmatpush.msra.mxu0 0.0
          %v1253 = vand.u32 %v1004, 4294901760
          %1254 = vmatpush.msra.mxu0 %v1253
          %v1255 = vand.u32 %v1002, 4294901760
          %1256 = vmatpush.msra.mxu0 %v1255
          %v1257 = vand.u32 %v1000, 4294901760
          %1258 = vmatpush.msra.mxu0 %v1257
          %v1259 = vand.u32 %v998, 4294901760
          %1260 = vmatpush.msra.mxu0 %v1259
          %v1261 = vand.u32 %v996, 4294901760
          %1262 = vmatpush.msra.mxu0 %v1261
          %v1263 = vand.u32 %v994, 4294901760
          %1264 = vmatpush.msra.mxu0 %v1263
          %v1265 = vand.u32 %v992, 4294901760
          %1266 = vmatpush.msra.mxu0 %v1265
          %v1267 = vand.u32 %v990, 4294901760
          %1268 = vmatpush.msra.mxu0 %v1267
          %v1269 = vand.u32 %v1006, 4294901760
          %v1270 = vsub.f32 %v1006, %v1269
          %v1271 = vand.u32 %v1270, 4294901760
          %v1272 = vsub.f32 %v1270, %v1271
          %v1273 = vand.u32 %v1272, 4294901760
          %1274 = vmatmul.f32.gmra.mxu0 %v1273
          %v1275 = vpop.f32.mrf.mxu0
          %v1276 = vadd.f32 0.0, %v1275
          %1277 = vdwg.mxu0
          %1278 = vmatpush.msra.mxu0 0.0
          %1279 = vmatpush.msra.mxu0 0.0
          %1280 = vmatpush.msra.mxu0 0.0
          %1281 = vmatpush.msra.mxu0 0.0
          %1282 = vmatpush.msra.mxu0 0.0
          %1283 = vmatpush.msra.mxu0 0.0
          %1284 = vmatpush.msra.mxu0 0.0
          %1285 = vmatpush.msra.mxu0 0.0
          %v1286 = vand.u32 %v1004, 4294901760
          %v1287 = vsub.f32 %v1004, %v1286
          %v1288 = vand.u32 %v1287, 4294901760
          %v1289 = vsub.f32 %v1287, %v1288
          %v1290 = vand.u32 %v1289, 4294901760
          %1291 = vmatpush.msra.mxu0 %v1290
          %v1292 = vand.u32 %v1002, 4294901760
          %v1293 = vsub.f32 %v1002, %v1292
          %v1294 = vand.u32 %v1293, 4294901760
          %v1295 = vsub.f32 %v1293, %v1294
          %v1296 = vand.u32 %v1295, 4294901760
          %1297 = vmatpush.msra.mxu0 %v1296
          %v1298 = vand.u32 %v1000, 4294901760
          %v1299 = vsub.f32 %v1000, %v1298
          %v1300 = vand.u32 %v1299, 4294901760
          %v1301 = vsub.f32 %v1299, %v1300
          %v1302 = vand.u32 %v1301, 4294901760
          %1303 = vmatpush.msra.mxu0 %v1302
          %v1304 = vand.u32 %v998, 4294901760
          %v1305 = vsub.f32 %v998, %v1304
          %v1306 = vand.u32 %v1305, 4294901760
          %v1307 = vsub.f32 %v1305, %v1306
          %v1308 = vand.u32 %v1307, 4294901760
          %1309 = vmatpush.msra.mxu0 %v1308
          %v1310 = vand.u32 %v996, 4294901760
          %v1311 = vsub.f32 %v996, %v1310
          %v1312 = vand.u32 %v1311, 4294901760
          %v1313 = vsub.f32 %v1311, %v1312
          %v1314 = vand.u32 %v1313, 4294901760
          %1315 = vmatpush.msra.mxu0 %v1314
          %v1316 = vand.u32 %v994, 4294901760
          %v1317 = vsub.f32 %v994, %v1316
          %v1318 = vand.u32 %v1317, 4294901760
          %v1319 = vsub.f32 %v1317, %v1318
          %v1320 = vand.u32 %v1319, 4294901760
          %1321 = vmatpush.msra.mxu0 %v1320
          %v1322 = vand.u32 %v992, 4294901760
          %v1323 = vsub.f32 %v992, %v1322
          %v1324 = vand.u32 %v1323, 4294901760
          %v1325 = vsub.f32 %v1323, %v1324
          %v1326 = vand.u32 %v1325, 4294901760
          %1327 = vmatpush.msra.mxu0 %v1326
          %v1328 = vand.u32 %v990, 4294901760
          %v1329 = vsub.f32 %v990, %v1328
          %v1330 = vand.u32 %v1329, 4294901760
          %v1331 = vsub.f32 %v1329, %v1330
          %v1332 = vand.u32 %v1331, 4294901760
          %1333 = vmatpush.msra.mxu0 %v1332
          %v1334 = vand.u32 %v1006, 4294901760
          %1335 = vmatmul.f32.gmra.mxu0 %v1334
          %v1336 = vpop.f32.mrf.mxu0
          %v1337 = vadd.f32 %v1276, %v1336
          %1338 = vdwg.mxu0
          %1339 = vmatpush.msra.mxu0 0.0
          %1340 = vmatpush.msra.mxu0 0.0
          %1341 = vmatpush.msra.mxu0 0.0
          %1342 = vmatpush.msra.mxu0 0.0
          %1343 = vmatpush.msra.mxu0 0.0
          %1344 = vmatpush.msra.mxu0 0.0
          %1345 = vmatpush.msra.mxu0 0.0
          %1346 = vmatpush.msra.mxu0 0.0
          %v1347 = vand.u32 %v1004, 4294901760
          %v1348 = vsub.f32 %v1004, %v1347
          %1349 = vmatpush.msra.mxu0 %v1348
          %v1350 = vand.u32 %v1002, 4294901760
          %v1351 = vsub.f32 %v1002, %v1350
          %1352 = vmatpush.msra.mxu0 %v1351
          %v1353 = vand.u32 %v1000, 4294901760
          %v1354 = vsub.f32 %v1000, %v1353
          %1355 = vmatpush.msra.mxu0 %v1354
          %v1356 = vand.u32 %v998, 4294901760
          %v1357 = vsub.f32 %v998, %v1356
          %1358 = vmatpush.msra.mxu0 %v1357
          %v1359 = vand.u32 %v996, 4294901760
          %v1360 = vsub.f32 %v996, %v1359
          %1361 = vmatpush.msra.mxu0 %v1360
          %v1362 = vand.u32 %v994, 4294901760
          %v1363 = vsub.f32 %v994, %v1362
          %1364 = vmatpush.msra.mxu0 %v1363
          %v1365 = vand.u32 %v992, 4294901760
          %v1366 = vsub.f32 %v992, %v1365
          %1367 = vmatpush.msra.mxu0 %v1366
          %v1368 = vand.u32 %v990, 4294901760
          %v1369 = vsub.f32 %v990, %v1368
          %1370 = vmatpush.msra.mxu0 %v1369
          %v1371 = vand.u32 %v1006, 4294901760
          %v1372 = vsub.f32 %v1006, %v1371
          %1373 = vmatmul.f32.gmra.mxu0 %v1372
          %v1374 = vpop.f32.mrf.mxu0
          %v1375 = vadd.f32 %v1337, %v1374
          %1376 = vdwg.mxu0
          %1377 = vmatpush.msra.mxu0 0.0
          %1378 = vmatpush.msra.mxu0 0.0
          %1379 = vmatpush.msra.mxu0 0.0
          %1380 = vmatpush.msra.mxu0 0.0
          %1381 = vmatpush.msra.mxu0 0.0
          %1382 = vmatpush.msra.mxu0 0.0
          %1383 = vmatpush.msra.mxu0 0.0
          %1384 = vmatpush.msra.mxu0 0.0
          %v1385 = vand.u32 %v1004, 4294901760
          %1386 = vmatpush.msra.mxu0 %v1385
          %v1387 = vand.u32 %v1002, 4294901760
          %1388 = vmatpush.msra.mxu0 %v1387
          %v1389 = vand.u32 %v1000, 4294901760
          %1390 = vmatpush.msra.mxu0 %v1389
          %v1391 = vand.u32 %v998, 4294901760
          %1392 = vmatpush.msra.mxu0 %v1391
          %v1393 = vand.u32 %v996, 4294901760
          %1394 = vmatpush.msra.mxu0 %v1393
          %v1395 = vand.u32 %v994, 4294901760
          %1396 = vmatpush.msra.mxu0 %v1395
          %v1397 = vand.u32 %v992, 4294901760
          %1398 = vmatpush.msra.mxu0 %v1397
          %v1399 = vand.u32 %v990, 4294901760
          %1400 = vmatpush.msra.mxu0 %v1399
          %v1401 = vand.u32 %v1006, 4294901760
          %v1402 = vsub.f32 %v1006, %v1401
          %v1403 = vand.u32 %v1402, 4294901760
          %1404 = vmatmul.f32.gmra.mxu0 %v1403
          %v1405 = vpop.f32.mrf.mxu0
          %v1406 = vadd.f32 %v1375, %v1405
          %1407 = vdwg.mxu0
          %1408 = vmatpush.msra.mxu0 0.0
          %1409 = vmatpush.msra.mxu0 0.0
          %1410 = vmatpush.msra.mxu0 0.0
          %1411 = vmatpush.msra.mxu0 0.0
          %1412 = vmatpush.msra.mxu0 0.0
          %1413 = vmatpush.msra.mxu0 0.0
          %1414 = vmatpush.msra.mxu0 0.0
          %1415 = vmatpush.msra.mxu0 0.0
          %v1416 = vand.u32 %v1004, 4294901760
          %v1417 = vsub.f32 %v1004, %v1416
          %v1418 = vand.u32 %v1417, 4294901760
          %1419 = vmatpush.msra.mxu0 %v1418
          %v1420 = vand.u32 %v1002, 4294901760
          %v1421 = vsub.f32 %v1002, %v1420
          %v1422 = vand.u32 %v1421, 4294901760
          %1423 = vmatpush.msra.mxu0 %v1422
          %v1424 = vand.u32 %v1000, 4294901760
          %v1425 = vsub.f32 %v1000, %v1424
          %v1426 = vand.u32 %v1425, 4294901760
          %1427 = vmatpush.msra.mxu0 %v1426
          %v1428 = vand.u32 %v998, 4294901760
          %v1429 = vsub.f32 %v998, %v1428
          %v1430 = vand.u32 %v1429, 4294901760
          %1431 = vmatpush.msra.mxu0 %v1430
          %v1432 = vand.u32 %v996, 4294901760
          %v1433 = vsub.f32 %v996, %v1432
          %v1434 = vand.u32 %v1433, 4294901760
          %1435 = vmatpush.msra.mxu0 %v1434
          %v1436 = vand.u32 %v994, 4294901760
          %v1437 = vsub.f32 %v994, %v1436
          %v1438 = vand.u32 %v1437, 4294901760
          %1439 = vmatpush.msra.mxu0 %v1438
          %v1440 = vand.u32 %v992, 4294901760
          %v1441 = vsub.f32 %v992, %v1440
          %v1442 = vand.u32 %v1441, 4294901760
          %1443 = vmatpush.msra.mxu0 %v1442
          %v1444 = vand.u32 %v990, 4294901760
          %v1445 = vsub.f32 %v990, %v1444
          %v1446 = vand.u32 %v1445, 4294901760
          %1447 = vmatpush.msra.mxu0 %v1446
          %v1448 = vand.u32 %v1006, 4294901760
          %1449 = vmatmul.f32.gmra.mxu0 %v1448
          %v1450 = vpop.f32.mrf.mxu0
          %v1451 = vadd.f32 %v1406, %v1450
          %1452 = vdwg.mxu0
          %1453 = vmatpush.msra.mxu0 0.0
          %1454 = vmatpush.msra.mxu0 0.0
          %1455 = vmatpush.msra.mxu0 0.0
          %1456 = vmatpush.msra.mxu0 0.0
          %1457 = vmatpush.msra.mxu0 0.0
          %1458 = vmatpush.msra.mxu0 0.0
          %1459 = vmatpush.msra.mxu0 0.0
          %1460 = vmatpush.msra.mxu0 0.0
          %v1461 = vand.u32 %v1004, 4294901760
          %1462 = vmatpush.msra.mxu0 %v1461
          %v1463 = vand.u32 %v1002, 4294901760
          %1464 = vmatpush.msra.mxu0 %v1463
          %v1465 = vand.u32 %v1000, 4294901760
          %1466 = vmatpush.msra.mxu0 %v1465
          %v1467 = vand.u32 %v998, 4294901760
          %1468 = vmatpush.msra.mxu0 %v1467
          %v1469 = vand.u32 %v996, 4294901760
          %1470 = vmatpush.msra.mxu0 %v1469
          %v1471 = vand.u32 %v994, 4294901760
          %1472 = vmatpush.msra.mxu0 %v1471
          %v1473 = vand.u32 %v992, 4294901760
          %1474 = vmatpush.msra.mxu0 %v1473
          %v1475 = vand.u32 %v990, 4294901760
          %1476 = vmatpush.msra.mxu0 %v1475
          %v1477 = vand.u32 %v1006, 4294901760
          %1478 = vmatmul.f32.gmra.mxu0 %v1477
          %v1479 = vpop.f32.mrf.mxu0
          %v1480 = vadd.f32 %v1451, %v1479
          %1481 = vdwg.mxu0
          %s1482 = sshra.s32 %s967, 3
          %s1483 = sand.u32 %s967, 7
          %s1484 = sshra.s32 %s967, 3
          %s1485 = sand.u32 %s967, 7
          %s1486 = smul.u32 %s1482, 2
          %s1487 = smul.u32 %s1486, 8
          %s1488 = sadd.s32 %s1487, %s1485
          %s1489 = scalar_lea.vmem [#allocation2], %s1488
          %v1490 = vld [vmem:[%s1489] ss:$8 sm:$0x3]
          %s1491 = sshra.s32 %s976, 3
          %s1492 = sand.u32 %s976, 7
          %s1493 = sshra.s32 %s976, 3
          %s1494 = sand.u32 %s976, 7
          %s1495 = smul.u32 %s1491, 2
          %s1496 = smul.u32 %s1495, 8
          %s1497 = sadd.s32 %s1496, %s1494
          %s1498 = scalar_lea.vmem [#allocation2], %s1497
          %v1499 = vld [vmem:[%s1498] ss:$8 sm:$0x3]
          %v1500 = vadd.f32 %v1490, %v1243
          %v1502 = vrot.slane %v1499, 1
          %v1504 = vadd.f32 %v1502, %v1480
          %v1505 = vstv %s967
          %vm1506 = vcmp.gt.s32.totalorder %v965, %v1505
          %v1507 = vxor.u32 %v1500, 2147483648
          %v1508 = vmul.f32 %v1507, 1.442695
          %v1509 = vpow.pop %v1508
          %v1510 = vadd.f32 %v1509, 1.0
          %v1511 = vrcp.pop %v1510
          %v1512 = vmul.f32 %v1510, %v1511
          %v1513 = vsub.f32 1.0, %v1512
          %v1514 = vmul.f32 %v1511, %v1513
          %v1515 = vadd.f32 %v1511, %v1514
          %vm1516 = vweird.f32 %v1510
          %vm1517 = vweird.f32 %v1511
          %vm1518 = vmor %vm1516, %vm1517
          %v1519 = vsel %vm1518, %v1511, %v1515
          %v1520 = vand.u32 2147483647, %v1510
          %vm1521 = vcmp.eq.f32.partialorder %v1520, 8.507059e+37
          %v1522 = vand.u32 %v1510, 2147483648
          %v1523 = vor.u32 1.1754944e-38, %v1522
          %v1524 = vsel %vm1521, %v1523, %v1519
          %v1525 = vmul.f32 1.0, %v1524
          %v1526 = vtanh.pop %v1500
          %v1527 = vmul.f32 %v1525, %v973
          %1529 = vrot.lane.b32.xlu0 %v1526, 64
          %v1530 = vpop.permute.xlu0 %1529
          %v1532 = vmul.f32 %v1525, %v1530
          %1534 = vrot.lane.b32.xlu0 %v1532, 32
          %v1535 = vpop.permute.xlu0 %1534
          %v1537 = vadd.f32 %v1527, %v1535
          %v1538 = vtanh.pop %v1537
          %1540 = vrot.lane.b32.xlu0 %v1538, 64
          %v1541 = vpop.permute.xlu0 %1540
          %v1543 = vmul.f32 %v1525, %v1541
          %v1544 = vsel %vm1506, 1, 0
          %1545 = vset.pattern.permute.xlu0 0
          %1546 = vperm.xlu0 %1545, %v1544
          %v1547 = vpop.permute.xlu0 %1546
          %v1548 = vperm.slane %v1547, 0
          %vm1549 = vcmp.eq.s32.totalorder %v1548, 1
          %v1550 = vsel %vm1549, %v1543, 0.0
          %v1551 = vsel %vm1549, %v1543, %v972
          %v1552 = vsel %vm1549, %v1537, %v973
          %v1553 = vstv %s976
          %vm1554 = vcmp.gt.s32.totalorder %v965, %v1553
          %v1555 = vxor.u32 %v1504, 2147483648
          %v1556 = vmul.f32 %v1555, 1.442695
          %v1557 = vpow.pop %v1556
          %v1558 = vadd.f32 %v1557, 1.0
          %v1559 = vrcp.pop %v1558
          %v1560 = vmul.f32 %v1558, %v1559
          %v1561 = vsub.f32 1.0, %v1560
          %v1562 = vmul.f32 %v1559, %v1561
          %v1563 = vadd.f32 %v1559, %v1562
          %vm1564 = vweird.f32 %v1558
          %vm1565 = vweird.f32 %v1559
          %vm1566 = vmor %vm1564, %vm1565
          %v1567 = vsel %vm1566, %v1559, %v1563
          %v1568 = vand.u32 2147483647, %v1558
          %vm1569 = vcmp.eq.f32.partialorder %v1568, 8.507059e+37
          %v1570 = vand.u32 %v1558, 2147483648
          %v1571 = vor.u32 1.1754944e-38, %v1570
          %v1572 = vsel %vm1569, %v1571, %v1567
          %v1573 = vmul.f32 1.0, %v1572
          %v1574 = vtanh.pop %v1504
          %v1575 = vmul.f32 %v1573, %v975
          %1577 = vrot.lane.b32.xlu0 %v1574, 64
          %v1578 = vpop.permute.xlu0 %1577
          %v1580 = vmul.f32 %v1573, %v1578
          %1582 = vrot.lane.b32.xlu0 %v1580, 32
          %v1583 = vpop.permute.xlu0 %1582
          %v1585 = vadd.f32 %v1575, %v1583
          %v1586 = vtanh.pop %v1585
          %1588 = vrot.lane.b32.xlu0 %v1586, 64
          %v1589 = vpop.permute.xlu0 %1588
          %v1591 = vmul.f32 %v1573, %v1589
          %v1592 = vsel %vm1554, 1, 0
          %1593 = vset.pattern.permute.xlu0 0
          %1594 = vperm.xlu0 %1593, %v1592
          %v1595 = vpop.permute.xlu0 %1594
          %v1596 = vperm.slane %v1595, 0
          %vm1597 = vcmp.eq.s32.totalorder %v1596, 1
          %v1598 = vsel %vm1597, %v1591, 0.0
          %v1599 = vsel %vm1597, %v1591, %v974
          %v1600 = vsel %vm1597, %v1585, %v975
          %s1601 = scalar_lea.vmem %s380, %s967
          %v1602 = vld [vmem:[%s1601] sm:$0x1]
          %v1603 = vld [vmem:[%s5] sm:$0xff]
          %v1604 = vld [vmem:[%s5 + $0x8] sm:$0xff]
          %v1605 = vld [vmem:[%s5 + $0x10] sm:$0xff]
          %v1606 = vld [vmem:[%s5 + $0x18] sm:$0xff]
          %v1607 = vld [vmem:[%s5 + $0x20] sm:$0xff]
          %v1608 = vld [vmem:[%s5 + $0x28] sm:$0xff]
          %v1609 = vld [vmem:[%s5 + $0x30] sm:$0xff]
          %v1610 = vld [vmem:[%s5 + $0x38] sm:$0xff]
          %v1612 = vsel %vm418, %v1602, 0
          %1614 = vmatpush.msra.mxu0 0.0
          %1615 = vmatpush.msra.mxu0 0.0
          %1616 = vmatpush.msra.mxu0 0.0
          %1617 = vmatpush.msra.mxu0 0.0
          %1618 = vmatpush.msra.mxu0 0.0
          %1619 = vmatpush.msra.mxu0 0.0
          %1620 = vmatpush.msra.mxu0 0.0
          %1621 = vmatpush.msra.mxu0 0.0
          %v1622 = vand.u32 %v1610, 4294901760
          %1623 = vmatpush.msra.mxu0 %v1622
          %v1624 = vand.u32 %v1609, 4294901760
          %1625 = vmatpush.msra.mxu0 %v1624
          %v1626 = vand.u32 %v1608, 4294901760
          %1627 = vmatpush.msra.mxu0 %v1626
          %v1628 = vand.u32 %v1607, 4294901760
          %1629 = vmatpush.msra.mxu0 %v1628
          %v1630 = vand.u32 %v1606, 4294901760
          %1631 = vmatpush.msra.mxu0 %v1630
          %v1632 = vand.u32 %v1605, 4294901760
          %1633 = vmatpush.msra.mxu0 %v1632
          %v1634 = vand.u32 %v1604, 4294901760
          %1635 = vmatpush.msra.mxu0 %v1634
          %v1636 = vand.u32 %v1603, 4294901760
          %1637 = vmatpush.msra.mxu0 %v1636
          %v1638 = vand.u32 %v1612, 4294901760
          %v1639 = vsub.f32 %v1612, %v1638
          %v1640 = vand.u32 %v1639, 4294901760
          %v1641 = vsub.f32 %v1639, %v1640
          %v1642 = vand.u32 %v1641, 4294901760
          %1643 = vmatmul.f32.gmra.mxu0 %v1642
          %v1644 = vpop.f32.mrf.mxu0
          %v1645 = vadd.f32 0.0, %v1644
          %1646 = vdwg.mxu0
          %1647 = vmatpush.msra.mxu0 0.0
          %1648 = vmatpush.msra.mxu0 0.0
          %1649 = vmatpush.msra.mxu0 0.0
          %1650 = vmatpush.msra.mxu0 0.0
          %1651 = vmatpush.msra.mxu0 0.0
          %1652 = vmatpush.msra.mxu0 0.0
          %1653 = vmatpush.msra.mxu0 0.0
          %1654 = vmatpush.msra.mxu0 0.0
          %v1655 = vand.u32 %v1610, 4294901760
          %v1656 = vsub.f32 %v1610, %v1655
          %v1657 = vand.u32 %v1656, 4294901760
          %v1658 = vsub.f32 %v1656, %v1657
          %v1659 = vand.u32 %v1658, 4294901760
          %1660 = vmatpush.msra.mxu0 %v1659
          %v1661 = vand.u32 %v1609, 4294901760
          %v1662 = vsub.f32 %v1609, %v1661
          %v1663 = vand.u32 %v1662, 4294901760
          %v1664 = vsub.f32 %v1662, %v1663
          %v1665 = vand.u32 %v1664, 4294901760
          %1666 = vmatpush.msra.mxu0 %v1665
          %v1667 = vand.u32 %v1608, 4294901760
          %v1668 = vsub.f32 %v1608, %v1667
          %v1669 = vand.u32 %v1668, 4294901760
          %v1670 = vsub.f32 %v1668, %v1669
          %v1671 = vand.u32 %v1670, 4294901760
          %1672 = vmatpush.msra.mxu0 %v1671
          %v1673 = vand.u32 %v1607, 4294901760
          %v1674 = vsub.f32 %v1607, %v1673
          %v1675 = vand.u32 %v1674, 4294901760
          %v1676 = vsub.f32 %v1674, %v1675
          %v1677 = vand.u32 %v1676, 4294901760
          %1678 = vmatpush.msra.mxu0 %v1677
          %v1679 = vand.u32 %v1606, 4294901760
          %v1680 = vsub.f32 %v1606, %v1679
          %v1681 = vand.u32 %v1680, 4294901760
          %v1682 = vsub.f32 %v1680, %v1681
          %v1683 = vand.u32 %v1682, 4294901760
          %1684 = vmatpush.msra.mxu0 %v1683
          %v1685 = vand.u32 %v1605, 4294901760
          %v1686 = vsub.f32 %v1605, %v1685
          %v1687 = vand.u32 %v1686, 4294901760
          %v1688 = vsub.f32 %v1686, %v1687
          %v1689 = vand.u32 %v1688, 4294901760
          %1690 = vmatpush.msra.mxu0 %v1689
          %v1691 = vand.u32 %v1604, 4294901760
          %v1692 = vsub.f32 %v1604, %v1691
          %v1693 = vand.u32 %v1692, 4294901760
          %v1694 = vsub.f32 %v1692, %v1693
          %v1695 = vand.u32 %v1694, 4294901760
          %1696 = vmatpush.msra.mxu0 %v1695
          %v1697 = vand.u32 %v1603, 4294901760
          %v1698 = vsub.f32 %v1603, %v1697
          %v1699 = vand.u32 %v1698, 4294901760
          %v1700 = vsub.f32 %v1698, %v1699
          %v1701 = vand.u32 %v1700, 4294901760
          %1702 = vmatpush.msra.mxu0 %v1701
          %v1703 = vand.u32 %v1612, 4294901760
          %1704 = vmatmul.f32.gmra.mxu0 %v1703
          %v1705 = vpop.f32.mrf.mxu0
          %v1706 = vadd.f32 %v1645, %v1705
          %1707 = vdwg.mxu0
          %1708 = vmatpush.msra.mxu0 0.0
          %1709 = vmatpush.msra.mxu0 0.0
          %1710 = vmatpush.msra.mxu0 0.0
          %1711 = vmatpush.msra.mxu0 0.0
          %1712 = vmatpush.msra.mxu0 0.0
          %1713 = vmatpush.msra.mxu0 0.0
          %1714 = vmatpush.msra.mxu0 0.0
          %1715 = vmatpush.msra.mxu0 0.0
          %v1716 = vand.u32 %v1610, 4294901760
          %v1717 = vsub.f32 %v1610, %v1716
          %1718 = vmatpush.msra.mxu0 %v1717
          %v1719 = vand.u32 %v1609, 4294901760
          %v1720 = vsub.f32 %v1609, %v1719
          %1721 = vmatpush.msra.mxu0 %v1720
          %v1722 = vand.u32 %v1608, 4294901760
          %v1723 = vsub.f32 %v1608, %v1722
          %1724 = vmatpush.msra.mxu0 %v1723
          %v1725 = vand.u32 %v1607, 4294901760
          %v1726 = vsub.f32 %v1607, %v1725
          %1727 = vmatpush.msra.mxu0 %v1726
          %v1728 = vand.u32 %v1606, 4294901760
          %v1729 = vsub.f32 %v1606, %v1728
          %1730 = vmatpush.msra.mxu0 %v1729
          %v1731 = vand.u32 %v1605, 4294901760
          %v1732 = vsub.f32 %v1605, %v1731
          %1733 = vmatpush.msra.mxu0 %v1732
          %v1734 = vand.u32 %v1604, 4294901760
          %v1735 = vsub.f32 %v1604, %v1734
          %1736 = vmatpush.msra.mxu0 %v1735
          %v1737 = vand.u32 %v1603, 4294901760
          %v1738 = vsub.f32 %v1603, %v1737
          %1739 = vmatpush.msra.mxu0 %v1738
          %v1740 = vand.u32 %v1612, 4294901760
          %v1741 = vsub.f32 %v1612, %v1740
          %1742 = vmatmul.f32.gmra.mxu0 %v1741
          %v1743 = vpop.f32.mrf.mxu0
          %v1744 = vadd.f32 %v1706, %v1743
          %1745 = vdwg.mxu0
          %1746 = vmatpush.msra.mxu0 0.0
          %1747 = vmatpush.msra.mxu0 0.0
          %1748 = vmatpush.msra.mxu0 0.0
          %1749 = vmatpush.msra.mxu0 0.0
          %1750 = vmatpush.msra.mxu0 0.0
          %1751 = vmatpush.msra.mxu0 0.0
          %1752 = vmatpush.msra.mxu0 0.0
          %1753 = vmatpush.msra.mxu0 0.0
          %v1754 = vand.u32 %v1610, 4294901760
          %1755 = vmatpush.msra.mxu0 %v1754
          %v1756 = vand.u32 %v1609, 4294901760
          %1757 = vmatpush.msra.mxu0 %v1756
          %v1758 = vand.u32 %v1608, 4294901760
          %1759 = vmatpush.msra.mxu0 %v1758
          %v1760 = vand.u32 %v1607, 4294901760
          %1761 = vmatpush.msra.mxu0 %v1760
          %v1762 = vand.u32 %v1606, 4294901760
          %1763 = vmatpush.msra.mxu0 %v1762
          %v1764 = vand.u32 %v1605, 4294901760
          %1765 = vmatpush.msra.mxu0 %v1764
          %v1766 = vand.u32 %v1604, 4294901760
          %1767 = vmatpush.msra.mxu0 %v1766
          %v1768 = vand.u32 %v1603, 4294901760
          %1769 = vmatpush.msra.mxu0 %v1768
          %v1770 = vand.u32 %v1612, 4294901760
          %v1771 = vsub.f32 %v1612, %v1770
          %v1772 = vand.u32 %v1771, 4294901760
          %1773 = vmatmul.f32.gmra.mxu0 %v1772
          %v1774 = vpop.f32.mrf.mxu0
          %v1775 = vadd.f32 %v1744, %v1774
          %1776 = vdwg.mxu0
          %1777 = vmatpush.msra.mxu0 0.0
          %1778 = vmatpush.msra.mxu0 0.0
          %1779 = vmatpush.msra.mxu0 0.0
          %1780 = vmatpush.msra.mxu0 0.0
          %1781 = vmatpush.msra.mxu0 0.0
          %1782 = vmatpush.msra.mxu0 0.0
          %1783 = vmatpush.msra.mxu0 0.0
          %1784 = vmatpush.msra.mxu0 0.0
          %v1785 = vand.u32 %v1610, 4294901760
          %v1786 = vsub.f32 %v1610, %v1785
          %v1787 = vand.u32 %v1786, 4294901760
          %1788 = vmatpush.msra.mxu0 %v1787
          %v1789 = vand.u32 %v1609, 4294901760
          %v1790 = vsub.f32 %v1609, %v1789
          %v1791 = vand.u32 %v1790, 4294901760
          %1792 = vmatpush.msra.mxu0 %v1791
          %v1793 = vand.u32 %v1608, 4294901760
          %v1794 = vsub.f32 %v1608, %v1793
          %v1795 = vand.u32 %v1794, 4294901760
          %1796 = vmatpush.msra.mxu0 %v1795
          %v1797 = vand.u32 %v1607, 4294901760
          %v1798 = vsub.f32 %v1607, %v1797
          %v1799 = vand.u32 %v1798, 4294901760
          %1800 = vmatpush.msra.mxu0 %v1799
          %v1801 = vand.u32 %v1606, 4294901760
          %v1802 = vsub.f32 %v1606, %v1801
          %v1803 = vand.u32 %v1802, 4294901760
          %1804 = vmatpush.msra.mxu0 %v1803
          %v1805 = vand.u32 %v1605, 4294901760
          %v1806 = vsub.f32 %v1605, %v1805
          %v1807 = vand.u32 %v1806, 4294901760
          %1808 = vmatpush.msra.mxu0 %v1807
          %v1809 = vand.u32 %v1604, 4294901760
          %v1810 = vsub.f32 %v1604, %v1809
          %v1811 = vand.u32 %v1810, 4294901760
          %1812 = vmatpush.msra.mxu0 %v1811
          %v1813 = vand.u32 %v1603, 4294901760
          %v1814 = vsub.f32 %v1603, %v1813
          %v1815 = vand.u32 %v1814, 4294901760
          %1816 = vmatpush.msra.mxu0 %v1815
          %v1817 = vand.u32 %v1612, 4294901760
          %1818 = vmatmul.f32.gmra.mxu0 %v1817
          %v1819 = vpop.f32.mrf.mxu0
          %v1820 = vadd.f32 %v1775, %v1819
          %1821 = vdwg.mxu0
          %1822 = vmatpush.msra.mxu0 0.0
          %1823 = vmatpush.msra.mxu0 0.0
          %1824 = vmatpush.msra.mxu0 0.0
          %1825 = vmatpush.msra.mxu0 0.0
          %1826 = vmatpush.msra.mxu0 0.0
          %1827 = vmatpush.msra.mxu0 0.0
          %1828 = vmatpush.msra.mxu0 0.0
          %1829 = vmatpush.msra.mxu0 0.0
          %v1830 = vand.u32 %v1610, 4294901760
          %1831 = vmatpush.msra.mxu0 %v1830
          %v1832 = vand.u32 %v1609, 4294901760
          %1833 = vmatpush.msra.mxu0 %v1832
          %v1834 = vand.u32 %v1608, 4294901760
          %1835 = vmatpush.msra.mxu0 %v1834
          %v1836 = vand.u32 %v1607, 4294901760
          %1837 = vmatpush.msra.mxu0 %v1836
          %v1838 = vand.u32 %v1606, 4294901760
          %1839 = vmatpush.msra.mxu0 %v1838
          %v1840 = vand.u32 %v1605, 4294901760
          %1841 = vmatpush.msra.mxu0 %v1840
          %v1842 = vand.u32 %v1604, 4294901760
          %1843 = vmatpush.msra.mxu0 %v1842
          %v1844 = vand.u32 %v1603, 4294901760
          %1845 = vmatpush.msra.mxu0 %v1844
          %v1846 = vand.u32 %v1612, 4294901760
          %1847 = vmatmul.f32.gmra.mxu0 %v1846
          %v1848 = vpop.f32.mrf.mxu0
          %v1849 = vadd.f32 %v1820, %v1848
          %1850 = vdwg.mxu0
          %s1851 = scalar_lea.vmem %s388, %s967
          %vm1852 = vcmask 0
          %1853 = vst.msk [vmem:[%s1851] sm:$0x1] %vm1852, %v1849
          %v1854 = vld [vmem:[%s6] sm:$0xff]
          %v1855 = vld [vmem:[%s6 + $0x8] sm:$0xff]
          %v1856 = vld [vmem:[%s6 + $0x10] sm:$0xff]
          %v1857 = vld [vmem:[%s6 + $0x18] sm:$0xff]
          %v1859 = vperm.slane %v1550, 0
          %1860 = vrot.lane.b32.xlu0 %v1859, 32
          %v1861 = vpop.permute.xlu0 %1860
          %v1862 = vsel %vm987, %v1861, 0
          %1864 = vmatpush.msra.mxu0 0.0
          %1865 = vmatpush.msra.mxu0 0.0
          %1866 = vmatpush.msra.mxu0 0.0
          %1867 = vmatpush.msra.mxu0 0.0
          %1868 = vmatpush.msra.mxu0 0.0
          %1869 = vmatpush.msra.mxu0 0.0
          %1870 = vmatpush.msra.mxu0 0.0
          %1871 = vmatpush.msra.mxu0 0.0
          %1872 = vmatpush.msra.mxu0 0.0
          %1873 = vmatpush.msra.mxu0 0.0
          %1874 = vmatpush.msra.mxu0 0.0
          %1875 = vmatpush.msra.mxu0 0.0
          %v1876 = vand.u32 %v1857, 4294901760
          %1877 = vmatpush.msra.mxu0 %v1876
          %v1878 = vand.u32 %v1856, 4294901760
          %1879 = vmatpush.msra.mxu0 %v1878
          %v1880 = vand.u32 %v1855, 4294901760
          %1881 = vmatpush.msra.mxu0 %v1880
          %v1882 = vand.u32 %v1854, 4294901760
          %1883 = vmatpush.msra.mxu0 %v1882
          %v1884 = vand.u32 %v1862, 4294901760
          %v1885 = vsub.f32 %v1862, %v1884
          %v1886 = vand.u32 %v1885, 4294901760
          %v1887 = vsub.f32 %v1885, %v1886
          %v1888 = vand.u32 %v1887, 4294901760
          %1889 = vmatmul.f32.gmra.mxu0 %v1888
          %v1890 = vpop.f32.mrf.mxu0
          %v1891 = vadd.f32 0.0, %v1890
          %1892 = vdwg.mxu0
          %1893 = vmatpush.msra.mxu0 0.0
          %1894 = vmatpush.msra.mxu0 0.0
          %1895 = vmatpush.msra.mxu0 0.0
          %1896 = vmatpush.msra.mxu0 0.0
          %1897 = vmatpush.msra.mxu0 0.0
          %1898 = vmatpush.msra.mxu0 0.0
          %1899 = vmatpush.msra.mxu0 0.0
          %1900 = vmatpush.msra.mxu0 0.0
          %1901 = vmatpush.msra.mxu0 0.0
          %1902 = vmatpush.msra.mxu0 0.0
          %1903 = vmatpush.msra.mxu0 0.0
          %1904 = vmatpush.msra.mxu0 0.0
          %v1905 = vand.u32 %v1857, 4294901760
          %v1906 = vsub.f32 %v1857, %v1905
          %v1907 = vand.u32 %v1906, 4294901760
          %v1908 = vsub.f32 %v1906, %v1907
          %v1909 = vand.u32 %v1908, 4294901760
          %1910 = vmatpush.msra.mxu0 %v1909
          %v1911 = vand.u32 %v1856, 4294901760
          %v1912 = vsub.f32 %v1856, %v1911
          %v1913 = vand.u32 %v1912, 4294901760
          %v1914 = vsub.f32 %v1912, %v1913
          %v1915 = vand.u32 %v1914, 4294901760
          %1916 = vmatpush.msra.mxu0 %v1915
          %v1917 = vand.u32 %v1855, 4294901760
          %v1918 = vsub.f32 %v1855, %v1917
          %v1919 = vand.u32 %v1918, 4294901760
          %v1920 = vsub.f32 %v1918, %v1919
          %v1921 = vand.u32 %v1920, 4294901760
          %1922 = vmatpush.msra.mxu0 %v1921
          %v1923 = vand.u32 %v1854, 4294901760
          %v1924 = vsub.f32 %v1854, %v1923
          %v1925 = vand.u32 %v1924, 4294901760
          %v1926 = vsub.f32 %v1924, %v1925
          %v1927 = vand.u32 %v1926, 4294901760
          %1928 = vmatpush.msra.mxu0 %v1927
          %v1929 = vand.u32 %v1862, 4294901760
          %1930 = vmatmul.f32.gmra.mxu0 %v1929
          %v1931 = vpop.f32.mrf.mxu0
          %v1932 = vadd.f32 %v1891, %v1931
          %1933 = vdwg.mxu0
          %1934 = vmatpush.msra.mxu0 0.0
          %1935 = vmatpush.msra.mxu0 0.0
          %1936 = vmatpush.msra.mxu0 0.0
          %1937 = vmatpush.msra.mxu0 0.0
          %1938 = vmatpush.msra.mxu0 0.0
          %1939 = vmatpush.msra.mxu0 0.0
          %1940 = vmatpush.msra.mxu0 0.0
          %1941 = vmatpush.msra.mxu0 0.0
          %1942 = vmatpush.msra.mxu0 0.0
          %1943 = vmatpush.msra.mxu0 0.0
          %1944 = vmatpush.msra.mxu0 0.0
          %1945 = vmatpush.msra.mxu0 0.0
          %v1946 = vand.u32 %v1857, 4294901760
          %v1947 = vsub.f32 %v1857, %v1946
          %1948 = vmatpush.msra.mxu0 %v1947
          %v1949 = vand.u32 %v1856, 4294901760
          %v1950 = vsub.f32 %v1856, %v1949
          %1951 = vmatpush.msra.mxu0 %v1950
          %v1952 = vand.u32 %v1855, 4294901760
          %v1953 = vsub.f32 %v1855, %v1952
          %1954 = vmatpush.msra.mxu0 %v1953
          %v1955 = vand.u32 %v1854, 4294901760
          %v1956 = vsub.f32 %v1854, %v1955
          %1957 = vmatpush.msra.mxu0 %v1956
          %v1958 = vand.u32 %v1862, 4294901760
          %v1959 = vsub.f32 %v1862, %v1958
          %1960 = vmatmul.f32.gmra.mxu0 %v1959
          %v1961 = vpop.f32.mrf.mxu0
          %v1962 = vadd.f32 %v1932, %v1961
          %1963 = vdwg.mxu0
          %1964 = vmatpush.msra.mxu0 0.0
          %1965 = vmatpush.msra.mxu0 0.0
          %1966 = vmatpush.msra.mxu0 0.0
          %1967 = vmatpush.msra.mxu0 0.0
          %1968 = vmatpush.msra.mxu0 0.0
          %1969 = vmatpush.msra.mxu0 0.0
          %1970 = vmatpush.msra.mxu0 0.0
          %1971 = vmatpush.msra.mxu0 0.0
          %1972 = vmatpush.msra.mxu0 0.0
          %1973 = vmatpush.msra.mxu0 0.0
          %1974 = vmatpush.msra.mxu0 0.0
          %1975 = vmatpush.msra.mxu0 0.0
          %v1976 = vand.u32 %v1857, 4294901760
          %1977 = vmatpush.msra.mxu0 %v1976
          %v1978 = vand.u32 %v1856, 4294901760
          %1979 = vmatpush.msra.mxu0 %v1978
          %v1980 = vand.u32 %v1855, 4294901760
          %1981 = vmatpush.msra.mxu0 %v1980
          %v1982 = vand.u32 %v1854, 4294901760
          %1983 = vmatpush.msra.mxu0 %v1982
          %v1984 = vand.u32 %v1862, 4294901760
          %v1985 = vsub.f32 %v1862, %v1984
          %v1986 = vand.u32 %v1985, 4294901760
          %1987 = vmatmul.f32.gmra.mxu0 %v1986
          %v1988 = vpop.f32.mrf.mxu0
          %v1989 = vadd.f32 %v1962, %v1988
          %1990 = vdwg.mxu0
          %1991 = vmatpush.msra.mxu0 0.0
          %1992 = vmatpush.msra.mxu0 0.0
          %1993 = vmatpush.msra.mxu0 0.0
          %1994 = vmatpush.msra.mxu0 0.0
          %1995 = vmatpush.msra.mxu0 0.0
          %1996 = vmatpush.msra.mxu0 0.0
          %1997 = vmatpush.msra.mxu0 0.0
          %1998 = vmatpush.msra.mxu0 0.0
          %1999 = vmatpush.msra.mxu0 0.0
          %2000 = vmatpush.msra.mxu0 0.0
          %2001 = vmatpush.msra.mxu0 0.0
          %2002 = vmatpush.msra.mxu0 0.0
          %v2003 = vand.u32 %v1857, 4294901760
          %v2004 = vsub.f32 %v1857, %v2003
          %v2005 = vand.u32 %v2004, 4294901760
          %2006 = vmatpush.msra.mxu0 %v2005
          %v2007 = vand.u32 %v1856, 4294901760
          %v2008 = vsub.f32 %v1856, %v2007
          %v2009 = vand.u32 %v2008, 4294901760
          %2010 = vmatpush.msra.mxu0 %v2009
          %v2011 = vand.u32 %v1855, 4294901760
          %v2012 = vsub.f32 %v1855, %v2011
          %v2013 = vand.u32 %v2012, 4294901760
          %2014 = vmatpush.msra.mxu0 %v2013
          %v2015 = vand.u32 %v1854, 4294901760
          %v2016 = vsub.f32 %v1854, %v2015
          %v2017 = vand.u32 %v2016, 4294901760
          %2018 = vmatpush.msra.mxu0 %v2017
          %v2019 = vand.u32 %v1862, 4294901760
          %2020 = vmatmul.f32.gmra.mxu0 %v2019
          %v2021 = vpop.f32.mrf.mxu0
          %v2022 = vadd.f32 %v1989, %v2021
          %2023 = vdwg.mxu0
          %2024 = vmatpush.msra.mxu0 0.0
          %2025 = vmatpush.msra.mxu0 0.0
          %2026 = vmatpush.msra.mxu0 0.0
          %2027 = vmatpush.msra.mxu0 0.0
          %2028 = vmatpush.msra.mxu0 0.0
          %2029 = vmatpush.msra.mxu0 0.0
          %2030 = vmatpush.msra.mxu0 0.0
          %2031 = vmatpush.msra.mxu0 0.0
          %2032 = vmatpush.msra.mxu0 0.0
          %2033 = vmatpush.msra.mxu0 0.0
          %2034 = vmatpush.msra.mxu0 0.0
          %2035 = vmatpush.msra.mxu0 0.0
          %v2036 = vand.u32 %v1857, 4294901760
          %2037 = vmatpush.msra.mxu0 %v2036
          %v2038 = vand.u32 %v1856, 4294901760
          %2039 = vmatpush.msra.mxu0 %v2038
          %v2040 = vand.u32 %v1855, 4294901760
          %2041 = vmatpush.msra.mxu0 %v2040
          %v2042 = vand.u32 %v1854, 4294901760
          %2043 = vmatpush.msra.mxu0 %v2042
          %v2044 = vand.u32 %v1862, 4294901760
          %2045 = vmatmul.f32.gmra.mxu0 %v2044
          %v2046 = vpop.f32.mrf.mxu0
          %v2047 = vadd.f32 %v2022, %v2046
          %2048 = vdwg.mxu0
          %s2049 = scalar_lea.vmem %s393, %s967
          %2050 = vst.msk [vmem:[%s2049] sm:$0x1] %vm1852, %v2047
          %v2051 = vld [vmem:[%s7] sm:$0xff]
          %v2052 = vld [vmem:[%s7 + $0x8] sm:$0xff]
          %v2053 = vld [vmem:[%s7 + $0x10] sm:$0xff]
          %v2054 = vld [vmem:[%s7 + $0x18] sm:$0xff]
          %v2056 = vperm.slane %v1598, 0
          %2057 = vrot.lane.b32.xlu0 %v2056, 32
          %v2058 = vpop.permute.xlu0 %2057
          %v2059 = vsel %vm987, %v2058, 0
          %2061 = vmatpush.msra.mxu0 0.0
          %2062 = vmatpush.msra.mxu0 0.0
          %2063 = vmatpush.msra.mxu0 0.0
          %2064 = vmatpush.msra.mxu0 0.0
          %2065 = vmatpush.msra.mxu0 0.0
          %2066 = vmatpush.msra.mxu0 0.0
          %2067 = vmatpush.msra.mxu0 0.0
          %2068 = vmatpush.msra.mxu0 0.0
          %2069 = vmatpush.msra.mxu0 0.0
          %2070 = vmatpush.msra.mxu0 0.0
          %2071 = vmatpush.msra.mxu0 0.0
          %2072 = vmatpush.msra.mxu0 0.0
          %v2073 = vand.u32 %v2054, 4294901760
          %2074 = vmatpush.msra.mxu0 %v2073
          %v2075 = vand.u32 %v2053, 4294901760
          %2076 = vmatpush.msra.mxu0 %v2075
          %v2077 = vand.u32 %v2052, 4294901760
          %2078 = vmatpush.msra.mxu0 %v2077
          %v2079 = vand.u32 %v2051, 4294901760
          %2080 = vmatpush.msra.mxu0 %v2079
          %v2081 = vand.u32 %v2059, 4294901760
          %v2082 = vsub.f32 %v2059, %v2081
          %v2083 = vand.u32 %v2082, 4294901760
          %v2084 = vsub.f32 %v2082, %v2083
          %v2085 = vand.u32 %v2084, 4294901760
          %2086 = vmatmul.f32.gmra.mxu0 %v2085
          %v2087 = vpop.f32.mrf.mxu0
          %v2088 = vadd.f32 0.0, %v2087
          %2089 = vdwg.mxu0
          %2090 = vmatpush.msra.mxu0 0.0
          %2091 = vmatpush.msra.mxu0 0.0
          %2092 = vmatpush.msra.mxu0 0.0
          %2093 = vmatpush.msra.mxu0 0.0
          %2094 = vmatpush.msra.mxu0 0.0
          %2095 = vmatpush.msra.mxu0 0.0
          %2096 = vmatpush.msra.mxu0 0.0
          %2097 = vmatpush.msra.mxu0 0.0
          %2098 = vmatpush.msra.mxu0 0.0
          %2099 = vmatpush.msra.mxu0 0.0
          %2100 = vmatpush.msra.mxu0 0.0
          %2101 = vmatpush.msra.mxu0 0.0
          %v2102 = vand.u32 %v2054, 4294901760
          %v2103 = vsub.f32 %v2054, %v2102
          %v2104 = vand.u32 %v2103, 4294901760
          %v2105 = vsub.f32 %v2103, %v2104
          %v2106 = vand.u32 %v2105, 4294901760
          %2107 = vmatpush.msra.mxu0 %v2106
          %v2108 = vand.u32 %v2053, 4294901760
          %v2109 = vsub.f32 %v2053, %v2108
          %v2110 = vand.u32 %v2109, 4294901760
          %v2111 = vsub.f32 %v2109, %v2110
          %v2112 = vand.u32 %v2111, 4294901760
          %2113 = vmatpush.msra.mxu0 %v2112
          %v2114 = vand.u32 %v2052, 4294901760
          %v2115 = vsub.f32 %v2052, %v2114
          %v2116 = vand.u32 %v2115, 4294901760
          %v2117 = vsub.f32 %v2115, %v2116
          %v2118 = vand.u32 %v2117, 4294901760
          %2119 = vmatpush.msra.mxu0 %v2118
          %v2120 = vand.u32 %v2051, 4294901760
          %v2121 = vsub.f32 %v2051, %v2120
          %v2122 = vand.u32 %v2121, 4294901760
          %v2123 = vsub.f32 %v2121, %v2122
          %v2124 = vand.u32 %v2123, 4294901760
          %2125 = vmatpush.msra.mxu0 %v2124
          %v2126 = vand.u32 %v2059, 4294901760
          %2127 = vmatmul.f32.gmra.mxu0 %v2126
          %v2128 = vpop.f32.mrf.mxu0
          %v2129 = vadd.f32 %v2088, %v2128
          %2130 = vdwg.mxu0
          %2131 = vmatpush.msra.mxu0 0.0
          %2132 = vmatpush.msra.mxu0 0.0
          %2133 = vmatpush.msra.mxu0 0.0
          %2134 = vmatpush.msra.mxu0 0.0
          %2135 = vmatpush.msra.mxu0 0.0
          %2136 = vmatpush.msra.mxu0 0.0
          %2137 = vmatpush.msra.mxu0 0.0
          %2138 = vmatpush.msra.mxu0 0.0
          %2139 = vmatpush.msra.mxu0 0.0
          %2140 = vmatpush.msra.mxu0 0.0
          %2141 = vmatpush.msra.mxu0 0.0
          %2142 = vmatpush.msra.mxu0 0.0
          %v2143 = vand.u32 %v2054, 4294901760
          %v2144 = vsub.f32 %v2054, %v2143
          %2145 = vmatpush.msra.mxu0 %v2144
          %v2146 = vand.u32 %v2053, 4294901760
          %v2147 = vsub.f32 %v2053, %v2146
          %2148 = vmatpush.msra.mxu0 %v2147
          %v2149 = vand.u32 %v2052, 4294901760
          %v2150 = vsub.f32 %v2052, %v2149
          %2151 = vmatpush.msra.mxu0 %v2150
          %v2152 = vand.u32 %v2051, 4294901760
          %v2153 = vsub.f32 %v2051, %v2152
          %2154 = vmatpush.msra.mxu0 %v2153
          %v2155 = vand.u32 %v2059, 4294901760
          %v2156 = vsub.f32 %v2059, %v2155
          %2157 = vmatmul.f32.gmra.mxu0 %v2156
          %v2158 = vpop.f32.mrf.mxu0
          %v2159 = vadd.f32 %v2129, %v2158
          %2160 = vdwg.mxu0
          %2161 = vmatpush.msra.mxu0 0.0
          %2162 = vmatpush.msra.mxu0 0.0
          %2163 = vmatpush.msra.mxu0 0.0
          %2164 = vmatpush.msra.mxu0 0.0
          %2165 = vmatpush.msra.mxu0 0.0
          %2166 = vmatpush.msra.mxu0 0.0
          %2167 = vmatpush.msra.mxu0 0.0
          %2168 = vmatpush.msra.mxu0 0.0
          %2169 = vmatpush.msra.mxu0 0.0
          %2170 = vmatpush.msra.mxu0 0.0
          %2171 = vmatpush.msra.mxu0 0.0
          %2172 = vmatpush.msra.mxu0 0.0
          %v2173 = vand.u32 %v2054, 4294901760
          %2174 = vmatpush.msra.mxu0 %v2173
          %v2175 = vand.u32 %v2053, 4294901760
          %2176 = vmatpush.msra.mxu0 %v2175
          %v2177 = vand.u32 %v2052, 4294901760
          %2178 = vmatpush.msra.mxu0 %v2177
          %v2179 = vand.u32 %v2051, 4294901760
          %2180 = vmatpush.msra.mxu0 %v2179
          %v2181 = vand.u32 %v2059, 4294901760
          %v2182 = vsub.f32 %v2059, %v2181
          %v2183 = vand.u32 %v2182, 4294901760
          %2184 = vmatmul.f32.gmra.mxu0 %v2183
          %v2185 = vpop.f32.mrf.mxu0
          %v2186 = vadd.f32 %v2159, %v2185
          %2187 = vdwg.mxu0
          %2188 = vmatpush.msra.mxu0 0.0
          %2189 = vmatpush.msra.mxu0 0.0
          %2190 = vmatpush.msra.mxu0 0.0
          %2191 = vmatpush.msra.mxu0 0.0
          %2192 = vmatpush.msra.mxu0 0.0
          %2193 = vmatpush.msra.mxu0 0.0
          %2194 = vmatpush.msra.mxu0 0.0
          %2195 = vmatpush.msra.mxu0 0.0
          %2196 = vmatpush.msra.mxu0 0.0
          %2197 = vmatpush.msra.mxu0 0.0
          %2198 = vmatpush.msra.mxu0 0.0
          %2199 = vmatpush.msra.mxu0 0.0
          %v2200 = vand.u32 %v2054, 4294901760
          %v2201 = vsub.f32 %v2054, %v2200
          %v2202 = vand.u32 %v2201, 4294901760
          %2203 = vmatpush.msra.mxu0 %v2202
          %v2204 = vand.u32 %v2053, 4294901760
          %v2205 = vsub.f32 %v2053, %v2204
          %v2206 = vand.u32 %v2205, 4294901760
          %2207 = vmatpush.msra.mxu0 %v2206
          %v2208 = vand.u32 %v2052, 4294901760
          %v2209 = vsub.f32 %v2052, %v2208
          %v2210 = vand.u32 %v2209, 4294901760
          %2211 = vmatpush.msra.mxu0 %v2210
          %v2212 = vand.u32 %v2051, 4294901760
          %v2213 = vsub.f32 %v2051, %v2212
          %v2214 = vand.u32 %v2213, 4294901760
          %2215 = vmatpush.msra.mxu0 %v2214
          %v2216 = vand.u32 %v2059, 4294901760
          %2217 = vmatmul.f32.gmra.mxu0 %v2216
          %v2218 = vpop.f32.mrf.mxu0
          %v2219 = vadd.f32 %v2186, %v2218
          %2220 = vdwg.mxu0
          %2221 = vmatpush.msra.mxu0 0.0
          %2222 = vmatpush.msra.mxu0 0.0
          %2223 = vmatpush.msra.mxu0 0.0
          %2224 = vmatpush.msra.mxu0 0.0
          %2225 = vmatpush.msra.mxu0 0.0
          %2226 = vmatpush.msra.mxu0 0.0
          %2227 = vmatpush.msra.mxu0 0.0
          %2228 = vmatpush.msra.mxu0 0.0
          %2229 = vmatpush.msra.mxu0 0.0
          %2230 = vmatpush.msra.mxu0 0.0
          %2231 = vmatpush.msra.mxu0 0.0
          %2232 = vmatpush.msra.mxu0 0.0
          %v2233 = vand.u32 %v2054, 4294901760
          %2234 = vmatpush.msra.mxu0 %v2233
          %v2235 = vand.u32 %v2053, 4294901760
          %2236 = vmatpush.msra.mxu0 %v2235
          %v2237 = vand.u32 %v2052, 4294901760
          %2238 = vmatpush.msra.mxu0 %v2237
          %v2239 = vand.u32 %v2051, 4294901760
          %2240 = vmatpush.msra.mxu0 %v2239
          %v2241 = vand.u32 %v2059, 4294901760
          %2242 = vmatmul.f32.gmra.mxu0 %v2241
          %v2243 = vpop.f32.mrf.mxu0
          %v2244 = vadd.f32 %v2219, %v2243
          %2245 = vdwg.mxu0
          %s2246 = scalar_lea.vmem [#allocation3], %s976
          %2247 = vst.msk [vmem:[%s2246] sm:$0x1] %vm1852, %v2244
        $region65: #{tpu_custom_call.1} parent=51 // loop_footer
          %s971 = sadd.s32 1, %s967
        $region66: #{tpu_custom_call.1} parent=51 // loop_footer_branch
          %966 = sbr.rel target = $region62
        $region67: #{tpu_custom_call.1} parent=51 // loop_exit
          _
        %v2248 = vld [vmem:[%s393] sm:$0xff]
        %v2249 = vld [vmem:[%s393 + $0x8] sm:$0xff]
        %v2250 = vld [vmem:[#allocation3] sm:$0xff]
        %v2251 = vld [vmem:[#allocation3 + $0x8] sm:$0xff]
        %v2252 = vadd.f32 %v2248, %v2250
        %v2253 = vadd.f32 %v2249, %v2251
        %vm2254 = vcmask 7168
        %2255 = vst.msk [vmem:[%s393] sm:$0xff] %vm2254, %v2252
        %2256 = vst.msk [vmem:[%s393 + $0x8] sm:$0xff] %vm2254, %v2253
        %p2257 = scmp.lt.s32.totalorder %s23, 1
        %s2258 = scalar_select %p2257, %s23, 1
        %s2259 = smul.addr %s2258, 2
        %s2260 = smul.addr %s2259, 8
        %s2261 = scalar_lea.vmem %s8, %s2260
        %p2262 = scmp.lt.s32.totalorder %s23, 1
        %s2263 = scalar_select %p2262, %s23, 1
        %s2264 = smul.addr %s2263, 2
        %s2265 = smul.addr %s2264, 8
        %s2266 = scalar_lea.vmem %s9, %s2265
        // Predicated region
        $region68: #{tpu_custom_call.1} parent=51 // pred_check
          %p2267 = pneg %p219
        $region69: #{tpu_custom_call.1} parent=51 // pred_check_branch
          %2269 = sbr.rel (%p2267) target = $region71
        $region70: #{tpu_custom_call.1} parent=51 // pred_region
          _
        $region71: #{tpu_custom_call.1} parent=51 // pred_fallthru
          _
        // Predicated region
        $region72: #{tpu_custom_call.1} parent=51 // pred_check
          %p2270 = pneg %p245
        $region73: #{tpu_custom_call.1} parent=51 // pred_check_branch
          %2272 = sbr.rel (%p2270) target = $region75
        $region74: #{tpu_custom_call.1} parent=51 // pred_region
          _
        $region75: #{tpu_custom_call.1} parent=51 // pred_fallthru
          _
      $region52: #{tpu_custom_call.1} parent=5 // pred_fallthru
        _
      %p2273 = scmp.le.s32.totalorder 2, %s18
      // Predicated region
      $region76: #{tpu_custom_call.1} parent=5 // pred_check
        %p2274 = pneg %p2273
      $region77: #{tpu_custom_call.1} parent=5 // pred_check_branch
        %2276 = sbr.rel (%p2274) target = $region79
      $region78: #{tpu_custom_call.1} parent=5 // pred_region
        %s2277 = ssub.s32 %s18, 2
        // Predicated region
        $region80: #{tpu_custom_call.1} parent=78 // pred_check
          %p2278 = pneg %p225
        $region81: #{tpu_custom_call.1} parent=78 // pred_check_branch
          %2280 = sbr.rel (%p2278) target = $region83
        $region82: #{tpu_custom_call.1} parent=78 // pred_region
          %p2281 = scmp.lt.s32.totalorder %s24, 1
          %s2282 = scalar_select %p2281, %s24, 1
          %s2283 = smul.addr %s2282, 2
          %s2284 = smul.addr %s2283, 8
          %s2285 = scalar_lea.vmem %s8, %s2284
        $region83: #{tpu_custom_call.1} parent=78 // pred_fallthru
          _
        // Predicated region
        $region84: #{tpu_custom_call.1} parent=78 // pred_check
          %p2286 = pneg %p251
        $region85: #{tpu_custom_call.1} parent=78 // pred_check_branch
          %2288 = sbr.rel (%p2286) target = $region87
        $region86: #{tpu_custom_call.1} parent=78 // pred_region
          %p2289 = scmp.lt.s32.totalorder %s24, 1
          %s2290 = scalar_select %p2289, %s24, 1
          %s2291 = smul.addr %s2290, 2
          %s2292 = smul.addr %s2291, 8
          %s2293 = scalar_lea.vmem %s9, %s2292
        $region87: #{tpu_custom_call.1} parent=78 // pred_fallthru
          _
      $region79: #{tpu_custom_call.1} parent=5 // pred_fallthru
        _
    $region6: #{tpu_custom_call.1} parent=1 // loop_footer
      %s22 = sadd.s32 1, %s18
    $region7: #{tpu_custom_call.1} parent=1 // loop_footer_branch
      %17 = sbr.rel target = $region3
    $region8: #{tpu_custom_call.1} parent=1 // loop_exit
      _
    %2294 = vsyncpa [#allocation5], 1
    %s2295 = scalar_lea.sflag [#allocation5], 1
    %2296 = vsyncpa %s2295, 1
    %2297 = vsyncpa [#allocation7], 1

</llo_original>
